<compile_context>
chip_gen: v7x
topology: tpu7x:2x2x1
jax: 0.10.0
libtpu: 0.0.40
codegen_flags: <defaults>
</compile_context>

<pallas_src>
import functools

import jax
import jax.numpy as jnp
import numpy as np
from jax import lax
from jax.experimental import pallas as pl
from jax.experimental.pallas import tpu as pltpu


def _round_up(x, m):
    return (x + m - 1) // m * m


def _lstm_text_kernel(x_ref, wih0_ref, whh0_ref, b0_ref,
                      wih1_ref, whh1_ref, b1_ref,
                      wlin_ref, blin_ref,
                      out_ref,
                      gates0_ref, gates1_ref, h0_ref, h1_ref,
                      *, S, Bp, H):
    """Whole-sequence 2-layer LSTM + Linear head in one kernel invocation.

    x_ref:      (S*Bp, V)   time-major, batch padded to Bp (multiple of 8)
    w*_ref:     pre-transposed weights so every matmul is `rows @ W`
    gates*_ref: (S*Bp, 4H)  per-layer hoisted input-projection scratch
    h*_ref:     (S*Bp, H)   per-layer hidden-state outputs over the sequence
    out_ref:    (S*Bp, V)   logits, written once at the end
    """
    cdt = wih0_ref.dtype  # matmul operand dtype (f32, or bf16 on v6e/v7x)

    # ---- Hoisted layer-0 input projection: one big MXU call + one bias add.
    gates0_ref[...] = (
        jnp.dot(x_ref[...], wih0_ref[...], preferred_element_type=jnp.float32)
        + b0_ref[...])

    # Gate-selection lane mask (i,f,o -> sigmoid; g -> tanh), hoisted once.
    lane = lax.broadcasted_iota(jnp.int32, (Bp, 4 * H), 1)
    is_g = (lane >= 2 * H) & (lane < 3 * H)

    def run_layer(gates_ref, whh, hout_ref):
        # Serial recurrence: only h @ Whh + elementwise gate math per step.
        def step(t, carry):
            h, c = carry
            row = pl.multiple_of(t * Bp, Bp)
            gates = (gates_ref[pl.ds(row, Bp), :]
                     + jnp.dot(h.astype(cdt), whh,
                               preferred_element_type=jnp.float32))
            # Two full-width EUP passes + one select (no 4x lane-sub-sliced
            # activations); slicing afterwards is cheap static VPU work.
            act = jnp.where(is_g, jnp.tanh(gates), jax.nn.sigmoid(gates))
            i = act[:, 0 * H:1 * H]
            f = act[:, 1 * H:2 * H]
            g = act[:, 2 * H:3 * H]
            o = act[:, 3 * H:4 * H]
            c_new = f * c + i * g
            h_new = o * jnp.tanh(c_new)
            hout_ref[pl.ds(row, Bp), :] = h_new
            return h_new, c_new

        z = jnp.zeros((Bp, H), jnp.float32)
        lax.fori_loop(0, S, step, (z, z), unroll=True)

    # ---- Layer 0 recurrence (writes all h0_t into h0_ref).
    run_layer(gates0_ref, whh0_ref[...], h0_ref)

    # ---- Hoisted layer-1 input projection over all layer-0 outputs.
    gates1_ref[...] = (
        jnp.dot(h0_ref[...].astype(cdt), wih1_ref[...],
                preferred_element_type=jnp.float32)
        + b1_ref[...])

    # ---- Layer 1 recurrence.
    run_layer(gates1_ref, whh1_ref[...], h1_ref)

    # ---- Linear head over the whole sequence; single dense store.
    out_ref[...] = (
        jnp.dot(h1_ref[...].astype(cdt), wlin_ref[...],
                preferred_element_type=jnp.float32)
        + blin_ref[...])


def text_generation_forward(x_bsv, params, compute_dtype=jnp.float32):
    """x_bsv: (B, S, V) float32. Returns (B, S, V) float32 logits.

    compute_dtype: dtype of the matmul *operands* (weights, x, h).
    Accumulation and all gate / state math stay float32.  Use
    jnp.bfloat16 on v6e/v7x for higher MXU throughput (looser numerics).
    """
    B, S, V = x_bsv.shape
    H = params["whh0"].shape[0]
    Bp = _round_up(max(B, 8), 8)  # sublane-aligned batch

    # Time-major, batch-padded, flattened to 2-D for big MXU-friendly matmuls.
    x_sbv = jnp.transpose(x_bsv, (1, 0, 2))
    x_pad = jnp.zeros((S, Bp, V), jnp.float32).at[:, :B, :].set(x_sbv)
    x_flat = x_pad.reshape(S * Bp, V).astype(compute_dtype)

    def w(name):  # matmul weights in compute dtype; biases stay f32
        return params[name].astype(compute_dtype)

    kernel = functools.partial(_lstm_text_kernel, S=S, Bp=Bp, H=H)

    out_flat = pl.pallas_call(
        kernel,
        out_shape=jax.ShapeDtypeStruct((S * Bp, V), jnp.float32),
        in_specs=[pl.BlockSpec(memory_space=pltpu.MemorySpace.VMEM)] * 9,
        out_specs=pl.BlockSpec(memory_space=pltpu.MemorySpace.VMEM),
        scratch_shapes=[
            pltpu.VMEM((S * Bp, 4 * H), jnp.float32),  # layer-0 gates (hoisted)
            pltpu.VMEM((S * Bp, 4 * H), jnp.float32),  # layer-1 gates (hoisted)
            pltpu.VMEM((S * Bp, H), jnp.float32),      # layer-0 hidden outputs
            pltpu.VMEM((S * Bp, H), jnp.float32),      # layer-1 hidden outputs
        ],
        compiler_params=pltpu.CompilerParams(
            vmem_limit_bytes=64 * 1024 * 1024),
    )(x_flat,
      w("wih0"), w("whh0"), params["b0"],
      w("wih1"), w("whh1"), params["b1"],
      w("wlin"), params["blin"])

    out_sbv = out_flat.reshape(S, Bp, V)[:, :B, :]
    return jnp.transpose(out_sbv, (1, 0, 2))


def make_params(key, vocab, hidden):
    """Deterministic synthetic params, PyTorch LSTM gate order (i,f,g,o).

    Weights stored pre-transposed so the kernel computes rows @ W directly.
    """
    H, V = hidden, vocab
    bound = 1.0 / np.sqrt(H)
    ks = jax.random.split(key, 11)

    def u(k, shape):
        return jax.random.uniform(k, shape, jnp.float32, -bound, bound)

    return {
        "wih0": u(ks[0], (V, 4 * H)),
        "whh0": u(ks[1], (H, 4 * H)),
        "b0":   u(ks[2], (1, 4 * H)) + u(ks[3], (1, 4 * H)),  # b_ih + b_hh
        "wih1": u(ks[4], (H, 4 * H)),
        "whh1": u(ks[5], (H, 4 * H)),
        "b1":   u(ks[6], (1, 4 * H)) + u(ks[7], (1, 4 * H)),
        "wlin": u(ks[8], (H, V)),
        "blin": u(ks[9], (1, V)),
    }


def reference_forward(x_bsv, params):
    """Pure-JAX reference matching nn.LSTM(2 layers, batch_first) + Linear."""
    B, S, V = x_bsv.shape
    H = params["whh0"].shape[0]

    def cell(x_t, h, c, wih, whh, b):
        gates = x_t @ wih + h @ whh + b
        i = jax.nn.sigmoid(gates[:, 0 * H:1 * H])
        f = jax.nn.sigmoid(gates[:, 1 * H:2 * H])
        g = jnp.tanh(gates[:, 2 * H:3 * H])
        o = jax.nn.sigmoid(gates[:, 3 * H:4 * H])
        c = f * c + i * g
        h = o * jnp.tanh(c)
        return h, c

    def step(carry, x_t):
        h0, c0, h1, c1 = carry
        h0, c0 = cell(x_t, h0, c0, params["wih0"], params["whh0"], params["b0"])
        h1, c1 = cell(h0, h1, c1, params["wih1"], params["whh1"], params["b1"])
        out = h1 @ params["wlin"] + params["blin"]
        return (h0, c0, h1, c1), out

    init = tuple(jnp.zeros((B, H), jnp.float32) for _ in range(4))
    _, outs = jax.lax.scan(step, init, jnp.transpose(x_bsv, (1, 0, 2)))
    return jnp.transpose(outs, (1, 0, 2))


if __name__ == "__main__":
    # Small shapes consistent with the module: batch=2, seq=8, vocab=32, hidden=32.
    B, S, V, H = 2, 8, 32, 32
    key = jax.random.PRNGKey(0)
    k_x, k_p = jax.random.split(key)

    x = jax.random.normal(k_x, (B, S, V), jnp.float32)
    params = make_params(k_p, V, H)
    ref = jax.block_until_ready(reference_forward(x, params))

    # f32 matmul operands: exact-path check.
    out_f32 = jax.block_until_ready(text_generation_forward(x, params))
    np.testing.assert_allclose(np.asarray(out_f32), np.asarray(ref),
                               atol=1e-4, rtol=1e-4)

    # bf16 matmul operands (v6e/v7x fast path): looser numerics expected.
    out_bf16 = jax.block_until_ready(
        text_generation_forward(x, params, compute_dtype=jnp.bfloat16))
    np.testing.assert_allclose(np.asarray(out_bf16), np.asarray(ref),
                               atol=1e-1, rtol=1e-1)

    print("KERNEL_OK")
</pallas_src>

<mosaic_0001>
module attributes {stable_mosaic.version = 11 : i64} {
  func.func @_lstm_text_kernel(%arg0: memref<64x32xf32, #tpu.memory_space<vmem>>, %arg1: memref<32x128xf32, #tpu.memory_space<vmem>>, %arg2: memref<32x128xf32, #tpu.memory_space<vmem>>, %arg3: memref<1x128xf32, #tpu.memory_space<vmem>>, %arg4: memref<32x128xf32, #tpu.memory_space<vmem>>, %arg5: memref<32x128xf32, #tpu.memory_space<vmem>>, %arg6: memref<1x128xf32, #tpu.memory_space<vmem>>, %arg7: memref<32x32xf32, #tpu.memory_space<vmem>>, %arg8: memref<1x32xf32, #tpu.memory_space<vmem>>, %arg9: memref<64x32xf32, #tpu.memory_space<vmem>>, %arg10: memref<64x128xf32, #tpu.memory_space<vmem>>, %arg11: memref<64x128xf32, #tpu.memory_space<vmem>>, %arg12: memref<64x32xf32, #tpu.memory_space<vmem>>, %arg13: memref<64x32xf32, #tpu.memory_space<vmem>>) attributes {dimension_semantics = [], scalar_prefetch = 0 : i64, scratch_operands = 4 : i64, tpu.core_type = #tpu.core_type<tc>} {
    %c0 = arith.constant 0 : index
    %c0_0 = arith.constant 0 : index
    %0 = vector.load %arg0[%c0, %c0_0] : memref<64x32xf32, #tpu.memory_space<vmem>>, vector<64x32xf32>
    %c0_1 = arith.constant 0 : index
    %c0_2 = arith.constant 0 : index
    %1 = vector.load %arg1[%c0_1, %c0_2] : memref<32x128xf32, #tpu.memory_space<vmem>>, vector<32x128xf32>
    %cst = arith.constant dense<0.000000e+00> : vector<64x128xf32>
    %2 = tpu.matmul %0, %1, %cst {dimension_numbers = #tpu.dot_dimension_numbers<[1], [0], [0], [1], [0, 0, 1, 1], [], []>} : vector<64x32xf32>, vector<32x128xf32>, vector<64x128xf32> -> vector<64x128xf32>
    %c0_3 = arith.constant 0 : index
    %c0_4 = arith.constant 0 : index
    %3 = vector.load %arg3[%c0_3, %c0_4] : memref<1x128xf32, #tpu.memory_space<vmem>>, vector<1x128xf32>
    %4 = vector.broadcast %3 : vector<1x128xf32> to vector<64x128xf32>
    %5 = arith.addf %2, %4 : vector<64x128xf32>
    %c0_5 = arith.constant 0 : index
    %c0_6 = arith.constant 0 : index
    %6 = vector.load %arg10[%c0_5, %c0_6] : memref<64x128xf32, #tpu.memory_space<vmem>>, vector<64x128xf32>
    tpu.vector_store %arg10[%c0_5, %c0_6], %5 {strides = array<i32>} : memref<64x128xf32, #tpu.memory_space<vmem>>, vector<64x128xf32>,
    %7 = tpu.iota {dimensions = array<i32: 1>} : vector<8x128xi32>
    %c64_i32 = arith.constant 64 : i32
    %8 = vector.broadcast %c64_i32 : i32 to vector<8x128xi32>
    %9 = arith.cmpi sge, %7, %8 : vector<8x128xi32>
    %c96_i32 = arith.constant 96 : i32
    %10 = vector.broadcast %c96_i32 : i32 to vector<8x128xi32>
    %11 = arith.cmpi slt, %7, %10 : vector<8x128xi32>
    %12 = arith.andi %9, %11 : vector<8x128xi1>
    %c0_7 = arith.constant 0 : index
    %c0_8 = arith.constant 0 : index
    %13 = vector.load %arg2[%c0_7, %c0_8] : memref<32x128xf32, #tpu.memory_space<vmem>>, vector<32x128xf32>
    %cst_9 = arith.constant 0.000000e+00 : f32
    %14 = vector.broadcast %cst_9 : f32 to vector<8x32xf32>
    %c0_i32 = arith.constant 0 : i32
    %c8_i32 = arith.constant 8 : i32
    %15 = arith.muli %c0_i32, %c8_i32 : i32
    %16 = tpu.assume_multiple %15, 8 : i32
    %17 = arith.index_cast %16 : i32 to index
    %c0_10 = arith.constant 0 : index
    %18 = vector.load %arg10[%17, %c0_10] : memref<64x128xf32, #tpu.memory_space<vmem>>, vector<8x128xf32>
    %cst_11 = arith.constant dense<0.000000e+00> : vector<8x128xf32>
    %19 = tpu.matmul %14, %13, %cst_11 {dimension_numbers = #tpu.dot_dimension_numbers<[1], [0], [0], [1], [0, 0, 1, 1], [], []>} : vector<8x32xf32>, vector<32x128xf32>, vector<8x128xf32> -> vector<8x128xf32>
    %20 = arith.addf %18, %19 : vector<8x128xf32>
    %21 = math.tanh %20 : vector<8x128xf32>
    %22 = arith.negf %20 : vector<8x128xf32>
    %23 = math.exp %22 : vector<8x128xf32>
    %cst_12 = arith.constant 1.000000e+00 : f32
    %24 = vector.broadcast %cst_12 : f32 to vector<8x128xf32>
    %25 = arith.addf %24, %23 : vector<8x128xf32>
    %26 = arith.divf %24, %25 : vector<8x128xf32>
    %27 = arith.select %12, %21, %26 : vector<8x128xi1>, vector<8x128xf32>
    %28 = vector.extract_strided_slice %27 {offsets = [0, 0], sizes = [8, 32], strides = [1, 1]} : vector<8x128xf32> to vector<8x32xf32>
    %29 = vector.extract_strided_slice %27 {offsets = [0, 32], sizes = [8, 32], strides = [1, 1]} : vector<8x128xf32> to vector<8x32xf32>
    %30 = vector.extract_strided_slice %27 {offsets = [0, 64], sizes = [8, 32], strides = [1, 1]} : vector<8x128xf32> to vector<8x32xf32>
    %31 = vector.extract_strided_slice %27 {offsets = [0, 96], sizes = [8, 32], strides = [1, 1]} : vector<8x128xf32> to vector<8x32xf32>
    %32 = arith.mulf %29, %14 : vector<8x32xf32>
    %33 = arith.mulf %28, %30 : vector<8x32xf32>
    %34 = arith.addf %32, %33 : vector<8x32xf32>
    %35 = math.tanh %34 : vector<8x32xf32>
    %36 = arith.mulf %31, %35 : vector<8x32xf32>
    %37 = arith.index_cast %16 : i32 to index
    %c0_13 = arith.constant 0 : index
    %38 = vector.load %arg12[%37, %c0_13] : memref<64x32xf32, #tpu.memory_space<vmem>>, vector<8x32xf32>
    tpu.vector_store %arg12[%37, %c0_13], %36 {strides = array<i32>} : memref<64x32xf32, #tpu.memory_space<vmem>>, vector<8x32xf32>,
    %c1_i32 = arith.constant 1 : i32
    %c8_i32_14 = arith.constant 8 : i32
    %39 = arith.muli %c1_i32, %c8_i32_14 : i32
    %40 = tpu.assume_multiple %39, 8 : i32
    %41 = arith.index_cast %40 : i32 to index
    %c0_15 = arith.constant 0 : index
    %42 = vector.load %arg10[%41, %c0_15] : memref<64x128xf32, #tpu.memory_space<vmem>>, vector<8x128xf32>
    %cst_16 = arith.constant dense<0.000000e+00> : vector<8x128xf32>
    %43 = tpu.matmul %36, %13, %cst_16 {dimension_numbers = #tpu.dot_dimension_numbers<[1], [0], [0], [1], [0, 0, 1, 1], [], []>} : vector<8x32xf32>, vector<32x128xf32>, vector<8x128xf32> -> vector<8x128xf32>
    %44 = arith.addf %42, %43 : vector<8x128xf32>
    %45 = math.tanh %44 : vector<8x128xf32>
    %46 = arith.negf %44 : vector<8x128xf32>
    %47 = math.exp %46 : vector<8x128xf32>
    %cst_17 = arith.constant 1.000000e+00 : f32
    %48 = vector.broadcast %cst_17 : f32 to vector<8x128xf32>
    %49 = arith.addf %48, %47 : vector<8x128xf32>
    %50 = arith.divf %48, %49 : vector<8x128xf32>
    %51 = arith.select %12, %45, %50 : vector<8x128xi1>, vector<8x128xf32>
    %52 = vector.extract_strided_slice %51 {offsets = [0, 0], sizes = [8, 32], strides = [1, 1]} : vector<8x128xf32> to vector<8x32xf32>
    %53 = vector.extract_strided_slice %51 {offsets = [0, 32], sizes = [8, 32], strides = [1, 1]} : vector<8x128xf32> to vector<8x32xf32>
    %54 = vector.extract_strided_slice %51 {offsets = [0, 64], sizes = [8, 32], strides = [1, 1]} : vector<8x128xf32> to vector<8x32xf32>
    %55 = vector.extract_strided_slice %51 {offsets = [0, 96], sizes = [8, 32], strides = [1, 1]} : vector<8x128xf32> to vector<8x32xf32>
    %56 = arith.mulf %53, %34 : vector<8x32xf32>
    %57 = arith.mulf %52, %54 : vector<8x32xf32>
    %58 = arith.addf %56, %57 : vector<8x32xf32>
    %59 = math.tanh %58 : vector<8x32xf32>
    %60 = arith.mulf %55, %59 : vector<8x32xf32>
    %61 = arith.index_cast %40 : i32 to index
    %c0_18 = arith.constant 0 : index
    %62 = vector.load %arg12[%61, %c0_18] : memref<64x32xf32, #tpu.memory_space<vmem>>, vector<8x32xf32>
    tpu.vector_store %arg12[%61, %c0_18], %60 {strides = array<i32>} : memref<64x32xf32, #tpu.memory_space<vmem>>, vector<8x32xf32>,
    %c2_i32 = arith.constant 2 : i32
    %c8_i32_19 = arith.constant 8 : i32
    %63 = arith.muli %c2_i32, %c8_i32_19 : i32
    %64 = tpu.assume_multiple %63, 8 : i32
    %65 = arith.index_cast %64 : i32 to index
    %c0_20 = arith.constant 0 : index
    %66 = vector.load %arg10[%65, %c0_20] : memref<64x128xf32, #tpu.memory_space<vmem>>, vector<8x128xf32>
    %cst_21 = arith.constant dense<0.000000e+00> : vector<8x128xf32>
    %67 = tpu.matmul %60, %13, %cst_21 {dimension_numbers = #tpu.dot_dimension_numbers<[1], [0], [0], [1], [0, 0, 1, 1], [], []>} : vector<8x32xf32>, vector<32x128xf32>, vector<8x128xf32> -> vector<8x128xf32>
    %68 = arith.addf %66, %67 : vector<8x128xf32>
    %69 = math.tanh %68 : vector<8x128xf32>
    %70 = arith.negf %68 : vector<8x128xf32>
    %71 = math.exp %70 : vector<8x128xf32>
    %cst_22 = arith.constant 1.000000e+00 : f32
    %72 = vector.broadcast %cst_22 : f32 to vector<8x128xf32>
    %73 = arith.addf %72, %71 : vector<8x128xf32>
    %74 = arith.divf %72, %73 : vector<8x128xf32>
    %75 = arith.select %12, %69, %74 : vector<8x128xi1>, vector<8x128xf32>
    %76 = vector.extract_strided_slice %75 {offsets = [0, 0], sizes = [8, 32], strides = [1, 1]} : vector<8x128xf32> to vector<8x32xf32>
    %77 = vector.extract_strided_slice %75 {offsets = [0, 32], sizes = [8, 32], strides = [1, 1]} : vector<8x128xf32> to vector<8x32xf32>
    %78 = vector.extract_strided_slice %75 {offsets = [0, 64], sizes = [8, 32], strides = [1, 1]} : vector<8x128xf32> to vector<8x32xf32>
    %79 = vector.extract_strided_slice %75 {offsets = [0, 96], sizes = [8, 32], strides = [1, 1]} : vector<8x128xf32> to vector<8x32xf32>
    %80 = arith.mulf %77, %58 : vector<8x32xf32>
    %81 = arith.mulf %76, %78 : vector<8x32xf32>
    %82 = arith.addf %80, %81 : vector<8x32xf32>
    %83 = math.tanh %82 : vector<8x32xf32>
    %84 = arith.mulf %79, %83 : vector<8x32xf32>
    %85 = arith.index_cast %64 : i32 to index
    %c0_23 = arith.constant 0 : index
    %86 = vector.load %arg12[%85, %c0_23] : memref<64x32xf32, #tpu.memory_space<vmem>>, vector<8x32xf32>
    tpu.vector_store %arg12[%85, %c0_23], %84 {strides = array<i32>} : memref<64x32xf32, #tpu.memory_space<vmem>>, vector<8x32xf32>,
    %c3_i32 = arith.constant 3 : i32
    %c8_i32_24 = arith.constant 8 : i32
    %87 = arith.muli %c3_i32, %c8_i32_24 : i32
    %88 = tpu.assume_multiple %87, 8 : i32
    %89 = arith.index_cast %88 : i32 to index
    %c0_25 = arith.constant 0 : index
    %90 = vector.load %arg10[%89, %c0_25] : memref<64x128xf32, #tpu.memory_space<vmem>>, vector<8x128xf32>
    %cst_26 = arith.constant dense<0.000000e+00> : vector<8x128xf32>
    %91 = tpu.matmul %84, %13, %cst_26 {dimension_numbers = #tpu.dot_dimension_numbers<[1], [0], [0], [1], [0, 0, 1, 1], [], []>} : vector<8x32xf32>, vector<32x128xf32>, vector<8x128xf32> -> vector<8x128xf32>
    %92 = arith.addf %90, %91 : vector<8x128xf32>
    %93 = math.tanh %92 : vector<8x128xf32>
    %94 = arith.negf %92 : vector<8x128xf32>
    %95 = math.exp %94 : vector<8x128xf32>
    %cst_27 = arith.constant 1.000000e+00 : f32
    %96 = vector.broadcast %cst_27 : f32 to vector<8x128xf32>
    %97 = arith.addf %96, %95 : vector<8x128xf32>
    %98 = arith.divf %96, %97 : vector<8x128xf32>
    %99 = arith.select %12, %93, %98 : vector<8x128xi1>, vector<8x128xf32>
    %100 = vector.extract_strided_slice %99 {offsets = [0, 0], sizes = [8, 32], strides = [1, 1]} : vector<8x128xf32> to vector<8x32xf32>
    %101 = vector.extract_strided_slice %99 {offsets = [0, 32], sizes = [8, 32], strides = [1, 1]} : vector<8x128xf32> to vector<8x32xf32>
    %102 = vector.extract_strided_slice %99 {offsets = [0, 64], sizes = [8, 32], strides = [1, 1]} : vector<8x128xf32> to vector<8x32xf32>
    %103 = vector.extract_strided_slice %99 {offsets = [0, 96], sizes = [8, 32], strides = [1, 1]} : vector<8x128xf32> to vector<8x32xf32>
    %104 = arith.mulf %101, %82 : vector<8x32xf32>
    %105 = arith.mulf %100, %102 : vector<8x32xf32>
    %106 = arith.addf %104, %105 : vector<8x32xf32>
    %107 = math.tanh %106 : vector<8x32xf32>
    %108 = arith.mulf %103, %107 : vector<8x32xf32>
    %109 = arith.index_cast %88 : i32 to index
    %c0_28 = arith.constant 0 : index
    %110 = vector.load %arg12[%109, %c0_28] : memref<64x32xf32, #tpu.memory_space<vmem>>, vector<8x32xf32>
    tpu.vector_store %arg12[%109, %c0_28], %108 {strides = array<i32>} : memref<64x32xf32, #tpu.memory_space<vmem>>, vector<8x32xf32>,
    %c4_i32 = arith.constant 4 : i32
    %c8_i32_29 = arith.constant 8 : i32
    %111 = arith.muli %c4_i32, %c8_i32_29 : i32
    %112 = tpu.assume_multiple %111, 8 : i32
    %113 = arith.index_cast %112 : i32 to index
    %c0_30 = arith.constant 0 : index
    %114 = vector.load %arg10[%113, %c0_30] : memref<64x128xf32, #tpu.memory_space<vmem>>, vector<8x128xf32>
    %cst_31 = arith.constant dense<0.000000e+00> : vector<8x128xf32>
    %115 = tpu.matmul %108, %13, %cst_31 {dimension_numbers = #tpu.dot_dimension_numbers<[1], [0], [0], [1], [0, 0, 1, 1], [], []>} : vector<8x32xf32>, vector<32x128xf32>, vector<8x128xf32> -> vector<8x128xf32>
    %116 = arith.addf %114, %115 : vector<8x128xf32>
    %117 = math.tanh %116 : vector<8x128xf32>
    %118 = arith.negf %116 : vector<8x128xf32>
    %119 = math.exp %118 : vector<8x128xf32>
    %cst_32 = arith.constant 1.000000e+00 : f32
    %120 = vector.broadcast %cst_32 : f32 to vector<8x128xf32>
    %121 = arith.addf %120, %119 : vector<8x128xf32>
    %122 = arith.divf %120, %121 : vector<8x128xf32>
    %123 = arith.select %12, %117, %122 : vector<8x128xi1>, vector<8x128xf32>
    %124 = vector.extract_strided_slice %123 {offsets = [0, 0], sizes = [8, 32], strides = [1, 1]} : vector<8x128xf32> to vector<8x32xf32>
    %125 = vector.extract_strided_slice %123 {offsets = [0, 32], sizes = [8, 32], strides = [1, 1]} : vector<8x128xf32> to vector<8x32xf32>
    %126 = vector.extract_strided_slice %123 {offsets = [0, 64], sizes = [8, 32], strides = [1, 1]} : vector<8x128xf32> to vector<8x32xf32>
    %127 = vector.extract_strided_slice %123 {offsets = [0, 96], sizes = [8, 32], strides = [1, 1]} : vector<8x128xf32> to vector<8x32xf32>
    %128 = arith.mulf %125, %106 : vector<8x32xf32>
    %129 = arith.mulf %124, %126 : vector<8x32xf32>
    %130 = arith.addf %128, %129 : vector<8x32xf32>
    %131 = math.tanh %130 : vector<8x32xf32>
    %132 = arith.mulf %127, %131 : vector<8x32xf32>
    %133 = arith.index_cast %112 : i32 to index
    %c0_33 = arith.constant 0 : index
    %134 = vector.load %arg12[%133, %c0_33] : memref<64x32xf32, #tpu.memory_space<vmem>>, vector<8x32xf32>
    tpu.vector_store %arg12[%133, %c0_33], %132 {strides = array<i32>} : memref<64x32xf32, #tpu.memory_space<vmem>>, vector<8x32xf32>,
    %c5_i32 = arith.constant 5 : i32
    %c8_i32_34 = arith.constant 8 : i32
    %135 = arith.muli %c5_i32, %c8_i32_34 : i32
    %136 = tpu.assume_multiple %135, 8 : i32
    %137 = arith.index_cast %136 : i32 to index
    %c0_35 = arith.constant 0 : index
    %138 = vector.load %arg10[%137, %c0_35] : memref<64x128xf32, #tpu.memory_space<vmem>>, vector<8x128xf32>
    %cst_36 = arith.constant dense<0.000000e+00> : vector<8x128xf32>
    %139 = tpu.matmul %132, %13, %cst_36 {dimension_numbers = #tpu.dot_dimension_numbers<[1], [0], [0], [1], [0, 0, 1, 1], [], []>} : vector<8x32xf32>, vector<32x128xf32>, vector<8x128xf32> -> vector<8x128xf32>
    %140 = arith.addf %138, %139 : vector<8x128xf32>
    %141 = math.tanh %140 : vector<8x128xf32>
    %142 = arith.negf %140 : vector<8x128xf32>
    %143 = math.exp %142 : vector<8x128xf32>
    %cst_37 = arith.constant 1.000000e+00 : f32
    %144 = vector.broadcast %cst_37 : f32 to vector<8x128xf32>
    %145 = arith.addf %144, %143 : vector<8x128xf32>
    %146 = arith.divf %144, %145 : vector<8x128xf32>
    %147 = arith.select %12, %141, %146 : vector<8x128xi1>, vector<8x128xf32>
    %148 = vector.extract_strided_slice %147 {offsets = [0, 0], sizes = [8, 32], strides = [1, 1]} : vector<8x128xf32> to vector<8x32xf32>
    %149 = vector.extract_strided_slice %147 {offsets = [0, 32], sizes = [8, 32], strides = [1, 1]} : vector<8x128xf32> to vector<8x32xf32>
    %150 = vector.extract_strided_slice %147 {offsets = [0, 64], sizes = [8, 32], strides = [1, 1]} : vector<8x128xf32> to vector<8x32xf32>
    %151 = vector.extract_strided_slice %147 {offsets = [0, 96], sizes = [8, 32], strides = [1, 1]} : vector<8x128xf32> to vector<8x32xf32>
    %152 = arith.mulf %149, %130 : vector<8x32xf32>
    %153 = arith.mulf %148, %150 : vector<8x32xf32>
    %154 = arith.addf %152, %153 : vector<8x32xf32>
    %155 = math.tanh %154 : vector<8x32xf32>
    %156 = arith.mulf %151, %155 : vector<8x32xf32>
    %157 = arith.index_cast %136 : i32 to index
    %c0_38 = arith.constant 0 : index
    %158 = vector.load %arg12[%157, %c0_38] : memref<64x32xf32, #tpu.memory_space<vmem>>, vector<8x32xf32>
    tpu.vector_store %arg12[%157, %c0_38], %156 {strides = array<i32>} : memref<64x32xf32, #tpu.memory_space<vmem>>, vector<8x32xf32>,
    %c6_i32 = arith.constant 6 : i32
    %c8_i32_39 = arith.constant 8 : i32
    %159 = arith.muli %c6_i32, %c8_i32_39 : i32
    %160 = tpu.assume_multiple %159, 8 : i32
    %161 = arith.index_cast %160 : i32 to index
    %c0_40 = arith.constant 0 : index
    %162 = vector.load %arg10[%161, %c0_40] : memref<64x128xf32, #tpu.memory_space<vmem>>, vector<8x128xf32>
    %cst_41 = arith.constant dense<0.000000e+00> : vector<8x128xf32>
    %163 = tpu.matmul %156, %13, %cst_41 {dimension_numbers = #tpu.dot_dimension_numbers<[1], [0], [0], [1], [0, 0, 1, 1], [], []>} : vector<8x32xf32>, vector<32x128xf32>, vector<8x128xf32> -> vector<8x128xf32>
    %164 = arith.addf %162, %163 : vector<8x128xf32>
    %165 = math.tanh %164 : vector<8x128xf32>
    %166 = arith.negf %164 : vector<8x128xf32>
    %167 = math.exp %166 : vector<8x128xf32>
    %cst_42 = arith.constant 1.000000e+00 : f32
    %168 = vector.broadcast %cst_42 : f32 to vector<8x128xf32>
    %169 = arith.addf %168, %167 : vector<8x128xf32>
    %170 = arith.divf %168, %169 : vector<8x128xf32>
    %171 = arith.select %12, %165, %170 : vector<8x128xi1>, vector<8x128xf32>
    %172 = vector.extract_strided_slice %171 {offsets = [0, 0], sizes = [8, 32], strides = [1, 1]} : vector<8x128xf32> to vector<8x32xf32>
    %173 = vector.extract_strided_slice %171 {offsets = [0, 32], sizes = [8, 32], strides = [1, 1]} : vector<8x128xf32> to vector<8x32xf32>
    %174 = vector.extract_strided_slice %171 {offsets = [0, 64], sizes = [8, 32], strides = [1, 1]} : vector<8x128xf32> to vector<8x32xf32>
    %175 = vector.extract_strided_slice %171 {offsets = [0, 96], sizes = [8, 32], strides = [1, 1]} : vector<8x128xf32> to vector<8x32xf32>
    %176 = arith.mulf %173, %154 : vector<8x32xf32>
    %177 = arith.mulf %172, %174 : vector<8x32xf32>
    %178 = arith.addf %176, %177 : vector<8x32xf32>
    %179 = math.tanh %178 : vector<8x32xf32>
    %180 = arith.mulf %175, %179 : vector<8x32xf32>
    %181 = arith.index_cast %160 : i32 to index
    %c0_43 = arith.constant 0 : index
    %182 = vector.load %arg12[%181, %c0_43] : memref<64x32xf32, #tpu.memory_space<vmem>>, vector<8x32xf32>
    tpu.vector_store %arg12[%181, %c0_43], %180 {strides = array<i32>} : memref<64x32xf32, #tpu.memory_space<vmem>>, vector<8x32xf32>,
    %c7_i32 = arith.constant 7 : i32
    %c8_i32_44 = arith.constant 8 : i32
    %183 = arith.muli %c7_i32, %c8_i32_44 : i32
    %184 = tpu.assume_multiple %183, 8 : i32
    %185 = arith.index_cast %184 : i32 to index
    %c0_45 = arith.constant 0 : index
    %186 = vector.load %arg10[%185, %c0_45] : memref<64x128xf32, #tpu.memory_space<vmem>>, vector<8x128xf32>
    %cst_46 = arith.constant dense<0.000000e+00> : vector<8x128xf32>
    %187 = tpu.matmul %180, %13, %cst_46 {dimension_numbers = #tpu.dot_dimension_numbers<[1], [0], [0], [1], [0, 0, 1, 1], [], []>} : vector<8x32xf32>, vector<32x128xf32>, vector<8x128xf32> -> vector<8x128xf32>
    %188 = arith.addf %186, %187 : vector<8x128xf32>
    %189 = math.tanh %188 : vector<8x128xf32>
    %190 = arith.negf %188 : vector<8x128xf32>
    %191 = math.exp %190 : vector<8x128xf32>
    %cst_47 = arith.constant 1.000000e+00 : f32
    %192 = vector.broadcast %cst_47 : f32 to vector<8x128xf32>
    %193 = arith.addf %192, %191 : vector<8x128xf32>
    %194 = arith.divf %192, %193 : vector<8x128xf32>
    %195 = arith.select %12, %189, %194 : vector<8x128xi1>, vector<8x128xf32>
    %196 = vector.extract_strided_slice %195 {offsets = [0, 0], sizes = [8, 32], strides = [1, 1]} : vector<8x128xf32> to vector<8x32xf32>
    %197 = vector.extract_strided_slice %195 {offsets = [0, 32], sizes = [8, 32], strides = [1, 1]} : vector<8x128xf32> to vector<8x32xf32>
    %198 = vector.extract_strided_slice %195 {offsets = [0, 64], sizes = [8, 32], strides = [1, 1]} : vector<8x128xf32> to vector<8x32xf32>
    %199 = vector.extract_strided_slice %195 {offsets = [0, 96], sizes = [8, 32], strides = [1, 1]} : vector<8x128xf32> to vector<8x32xf32>
    %200 = arith.mulf %197, %178 : vector<8x32xf32>
    %201 = arith.mulf %196, %198 : vector<8x32xf32>
    %202 = arith.addf %200, %201 : vector<8x32xf32>
    %203 = math.tanh %202 : vector<8x32xf32>
    %204 = arith.mulf %199, %203 : vector<8x32xf32>
    %205 = arith.index_cast %184 : i32 to index
    %c0_48 = arith.constant 0 : index
    %206 = vector.load %arg12[%205, %c0_48] : memref<64x32xf32, #tpu.memory_space<vmem>>, vector<8x32xf32>
    tpu.vector_store %arg12[%205, %c0_48], %204 {strides = array<i32>} : memref<64x32xf32, #tpu.memory_space<vmem>>, vector<8x32xf32>,
    %c8_i32_49 = arith.constant 8 : i32
    %c0_50 = arith.constant 0 : index
    %c0_51 = arith.constant 0 : index
    %207 = vector.load %arg12[%c0_50, %c0_51] : memref<64x32xf32, #tpu.memory_space<vmem>>, vector<64x32xf32>
    %c0_52 = arith.constant 0 : index
    %c0_53 = arith.constant 0 : index
    %208 = vector.load %arg4[%c0_52, %c0_53] : memref<32x128xf32, #tpu.memory_space<vmem>>, vector<32x128xf32>
    %cst_54 = arith.constant dense<0.000000e+00> : vector<64x128xf32>
    %209 = tpu.matmul %207, %208, %cst_54 {dimension_numbers = #tpu.dot_dimension_numbers<[1], [0], [0], [1], [0, 0, 1, 1], [], []>} : vector<64x32xf32>, vector<32x128xf32>, vector<64x128xf32> -> vector<64x128xf32>
    %c0_55 = arith.constant 0 : index
    %c0_56 = arith.constant 0 : index
    %210 = vector.load %arg6[%c0_55, %c0_56] : memref<1x128xf32, #tpu.memory_space<vmem>>, vector<1x128xf32>
    %211 = vector.broadcast %210 : vector<1x128xf32> to vector<64x128xf32>
    %212 = arith.addf %209, %211 : vector<64x128xf32>
    %c0_57 = arith.constant 0 : index
    %c0_58 = arith.constant 0 : index
    %213 = vector.load %arg11[%c0_57, %c0_58] : memref<64x128xf32, #tpu.memory_space<vmem>>, vector<64x128xf32>
    tpu.vector_store %arg11[%c0_57, %c0_58], %212 {strides = array<i32>} : memref<64x128xf32, #tpu.memory_space<vmem>>, vector<64x128xf32>,
    %c0_59 = arith.constant 0 : index
    %c0_60 = arith.constant 0 : index
    %214 = vector.load %arg5[%c0_59, %c0_60] : memref<32x128xf32, #tpu.memory_space<vmem>>, vector<32x128xf32>
    %cst_61 = arith.constant 0.000000e+00 : f32
    %215 = vector.broadcast %cst_61 : f32 to vector<8x32xf32>
    %c0_i32_62 = arith.constant 0 : i32
    %c8_i32_63 = arith.constant 8 : i32
    %216 = arith.muli %c0_i32_62, %c8_i32_63 : i32
    %217 = tpu.assume_multiple %216, 8 : i32
    %218 = arith.index_cast %217 : i32 to index
    %c0_64 = arith.constant 0 : index
    %219 = vector.load %arg11[%218, %c0_64] : memref<64x128xf32, #tpu.memory_space<vmem>>, vector<8x128xf32>
    %cst_65 = arith.constant dense<0.000000e+00> : vector<8x128xf32>
    %220 = tpu.matmul %215, %214, %cst_65 {dimension_numbers = #tpu.dot_dimension_numbers<[1], [0], [0], [1], [0, 0, 1, 1], [], []>} : vector<8x32xf32>, vector<32x128xf32>, vector<8x128xf32> -> vector<8x128xf32>
    %221 = arith.addf %219, %220 : vector<8x128xf32>
    %222 = math.tanh %221 : vector<8x128xf32>
    %223 = arith.negf %221 : vector<8x128xf32>
    %224 = math.exp %223 : vector<8x128xf32>
    %cst_66 = arith.constant 1.000000e+00 : f32
    %225 = vector.broadcast %cst_66 : f32 to vector<8x128xf32>
    %226 = arith.addf %225, %224 : vector<8x128xf32>
    %227 = arith.divf %225, %226 : vector<8x128xf32>
    %228 = arith.select %12, %222, %227 : vector<8x128xi1>, vector<8x128xf32>
    %229 = vector.extract_strided_slice %228 {offsets = [0, 0], sizes = [8, 32], strides = [1, 1]} : vector<8x128xf32> to vector<8x32xf32>
    %230 = vector.extract_strided_slice %228 {offsets = [0, 32], sizes = [8, 32], strides = [1, 1]} : vector<8x128xf32> to vector<8x32xf32>
    %231 = vector.extract_strided_slice %228 {offsets = [0, 64], sizes = [8, 32], strides = [1, 1]} : vector<8x128xf32> to vector<8x32xf32>
    %232 = vector.extract_strided_slice %228 {offsets = [0, 96], sizes = [8, 32], strides = [1, 1]} : vector<8x128xf32> to vector<8x32xf32>
    %233 = arith.mulf %230, %215 : vector<8x32xf32>
    %234 = arith.mulf %229, %231 : vector<8x32xf32>
    %235 = arith.addf %233, %234 : vector<8x32xf32>
    %236 = math.tanh %235 : vector<8x32xf32>
    %237 = arith.mulf %232, %236 : vector<8x32xf32>
    %238 = arith.index_cast %217 : i32 to index
    %c0_67 = arith.constant 0 : index
    %239 = vector.load %arg13[%238, %c0_67] : memref<64x32xf32, #tpu.memory_space<vmem>>, vector<8x32xf32>
    tpu.vector_store %arg13[%238, %c0_67], %237 {strides = array<i32>} : memref<64x32xf32, #tpu.memory_space<vmem>>, vector<8x32xf32>,
    %c1_i32_68 = arith.constant 1 : i32
    %c8_i32_69 = arith.constant 8 : i32
    %240 = arith.muli %c1_i32_68, %c8_i32_69 : i32
    %241 = tpu.assume_multiple %240, 8 : i32
    %242 = arith.index_cast %241 : i32 to index
    %c0_70 = arith.constant 0 : index
    %243 = vector.load %arg11[%242, %c0_70] : memref<64x128xf32, #tpu.memory_space<vmem>>, vector<8x128xf32>
    %cst_71 = arith.constant dense<0.000000e+00> : vector<8x128xf32>
    %244 = tpu.matmul %237, %214, %cst_71 {dimension_numbers = #tpu.dot_dimension_numbers<[1], [0], [0], [1], [0, 0, 1, 1], [], []>} : vector<8x32xf32>, vector<32x128xf32>, vector<8x128xf32> -> vector<8x128xf32>
    %245 = arith.addf %243, %244 : vector<8x128xf32>
    %246 = math.tanh %245 : vector<8x128xf32>
    %247 = arith.negf %245 : vector<8x128xf32>
    %248 = math.exp %247 : vector<8x128xf32>
    %cst_72 = arith.constant 1.000000e+00 : f32
    %249 = vector.broadcast %cst_72 : f32 to vector<8x128xf32>
    %250 = arith.addf %249, %248 : vector<8x128xf32>
    %251 = arith.divf %249, %250 : vector<8x128xf32>
    %252 = arith.select %12, %246, %251 : vector<8x128xi1>, vector<8x128xf32>
    %253 = vector.extract_strided_slice %252 {offsets = [0, 0], sizes = [8, 32], strides = [1, 1]} : vector<8x128xf32> to vector<8x32xf32>
    %254 = vector.extract_strided_slice %252 {offsets = [0, 32], sizes = [8, 32], strides = [1, 1]} : vector<8x128xf32> to vector<8x32xf32>
    %255 = vector.extract_strided_slice %252 {offsets = [0, 64], sizes = [8, 32], strides = [1, 1]} : vector<8x128xf32> to vector<8x32xf32>
    %256 = vector.extract_strided_slice %252 {offsets = [0, 96], sizes = [8, 32], strides = [1, 1]} : vector<8x128xf32> to vector<8x32xf32>
    %257 = arith.mulf %254, %235 : vector<8x32xf32>
    %258 = arith.mulf %253, %255 : vector<8x32xf32>
    %259 = arith.addf %257, %258 : vector<8x32xf32>
    %260 = math.tanh %259 : vector<8x32xf32>
    %261 = arith.mulf %256, %260 : vector<8x32xf32>
    %262 = arith.index_cast %241 : i32 to index
    %c0_73 = arith.constant 0 : index
    %263 = vector.load %arg13[%262, %c0_73] : memref<64x32xf32, #tpu.memory_space<vmem>>, vector<8x32xf32>
    tpu.vector_store %arg13[%262, %c0_73], %261 {strides = array<i32>} : memref<64x32xf32, #tpu.memory_space<vmem>>, vector<8x32xf32>,
    %c2_i32_74 = arith.constant 2 : i32
    %c8_i32_75 = arith.constant 8 : i32
    %264 = arith.muli %c2_i32_74, %c8_i32_75 : i32
    %265 = tpu.assume_multiple %264, 8 : i32
    %266 = arith.index_cast %265 : i32 to index
    %c0_76 = arith.constant 0 : index
    %267 = vector.load %arg11[%266, %c0_76] : memref<64x128xf32, #tpu.memory_space<vmem>>, vector<8x128xf32>
    %cst_77 = arith.constant dense<0.000000e+00> : vector<8x128xf32>
    %268 = tpu.matmul %261, %214, %cst_77 {dimension_numbers = #tpu.dot_dimension_numbers<[1], [0], [0], [1], [0, 0, 1, 1], [], []>} : vector<8x32xf32>, vector<32x128xf32>, vector<8x128xf32> -> vector<8x128xf32>
    %269 = arith.addf %267, %268 : vector<8x128xf32>
    %270 = math.tanh %269 : vector<8x128xf32>
    %271 = arith.negf %269 : vector<8x128xf32>
    %272 = math.exp %271 : vector<8x128xf32>
    %cst_78 = arith.constant 1.000000e+00 : f32
    %273 = vector.broadcast %cst_78 : f32 to vector<8x128xf32>
    %274 = arith.addf %273, %272 : vector<8x128xf32>
    %275 = arith.divf %273, %274 : vector<8x128xf32>
    %276 = arith.select %12, %270, %275 : vector<8x128xi1>, vector<8x128xf32>
    %277 = vector.extract_strided_slice %276 {offsets = [0, 0], sizes = [8, 32], strides = [1, 1]} : vector<8x128xf32> to vector<8x32xf32>
    %278 = vector.extract_strided_slice %276 {offsets = [0, 32], sizes = [8, 32], strides = [1, 1]} : vector<8x128xf32> to vector<8x32xf32>
    %279 = vector.extract_strided_slice %276 {offsets = [0, 64], sizes = [8, 32], strides = [1, 1]} : vector<8x128xf32> to vector<8x32xf32>
    %280 = vector.extract_strided_slice %276 {offsets = [0, 96], sizes = [8, 32], strides = [1, 1]} : vector<8x128xf32> to vector<8x32xf32>
    %281 = arith.mulf %278, %259 : vector<8x32xf32>
    %282 = arith.mulf %277, %279 : vector<8x32xf32>
    %283 = arith.addf %281, %282 : vector<8x32xf32>
    %284 = math.tanh %283 : vector<8x32xf32>
    %285 = arith.mulf %280, %284 : vector<8x32xf32>
    %286 = arith.index_cast %265 : i32 to index
    %c0_79 = arith.constant 0 : index
    %287 = vector.load %arg13[%286, %c0_79] : memref<64x32xf32, #tpu.memory_space<vmem>>, vector<8x32xf32>
    tpu.vector_store %arg13[%286, %c0_79], %285 {strides = array<i32>} : memref<64x32xf32, #tpu.memory_space<vmem>>, vector<8x32xf32>,
    %c3_i32_80 = arith.constant 3 : i32
    %c8_i32_81 = arith.constant 8 : i32
    %288 = arith.muli %c3_i32_80, %c8_i32_81 : i32
    %289 = tpu.assume_multiple %288, 8 : i32
    %290 = arith.index_cast %289 : i32 to index
    %c0_82 = arith.constant 0 : index
    %291 = vector.load %arg11[%290, %c0_82] : memref<64x128xf32, #tpu.memory_space<vmem>>, vector<8x128xf32>
    %cst_83 = arith.constant dense<0.000000e+00> : vector<8x128xf32>
    %292 = tpu.matmul %285, %214, %cst_83 {dimension_numbers = #tpu.dot_dimension_numbers<[1], [0], [0], [1], [0, 0, 1, 1], [], []>} : vector<8x32xf32>, vector<32x128xf32>, vector<8x128xf32> -> vector<8x128xf32>
    %293 = arith.addf %291, %292 : vector<8x128xf32>
    %294 = math.tanh %293 : vector<8x128xf32>
    %295 = arith.negf %293 : vector<8x128xf32>
    %296 = math.exp %295 : vector<8x128xf32>
    %cst_84 = arith.constant 1.000000e+00 : f32
    %297 = vector.broadcast %cst_84 : f32 to vector<8x128xf32>
    %298 = arith.addf %297, %296 : vector<8x128xf32>
    %299 = arith.divf %297, %298 : vector<8x128xf32>
    %300 = arith.select %12, %294, %299 : vector<8x128xi1>, vector<8x128xf32>
    %301 = vector.extract_strided_slice %300 {offsets = [0, 0], sizes = [8, 32], strides = [1, 1]} : vector<8x128xf32> to vector<8x32xf32>
    %302 = vector.extract_strided_slice %300 {offsets = [0, 32], sizes = [8, 32], strides = [1, 1]} : vector<8x128xf32> to vector<8x32xf32>
    %303 = vector.extract_strided_slice %300 {offsets = [0, 64], sizes = [8, 32], strides = [1, 1]} : vector<8x128xf32> to vector<8x32xf32>
    %304 = vector.extract_strided_slice %300 {offsets = [0, 96], sizes = [8, 32], strides = [1, 1]} : vector<8x128xf32> to vector<8x32xf32>
    %305 = arith.mulf %302, %283 : vector<8x32xf32>
    %306 = arith.mulf %301, %303 : vector<8x32xf32>
    %307 = arith.addf %305, %306 : vector<8x32xf32>
    %308 = math.tanh %307 : vector<8x32xf32>
    %309 = arith.mulf %304, %308 : vector<8x32xf32>
    %310 = arith.index_cast %289 : i32 to index
    %c0_85 = arith.constant 0 : index
    %311 = vector.load %arg13[%310, %c0_85] : memref<64x32xf32, #tpu.memory_space<vmem>>, vector<8x32xf32>
    tpu.vector_store %arg13[%310, %c0_85], %309 {strides = array<i32>} : memref<64x32xf32, #tpu.memory_space<vmem>>, vector<8x32xf32>,
    %c4_i32_86 = arith.constant 4 : i32
    %c8_i32_87 = arith.constant 8 : i32
    %312 = arith.muli %c4_i32_86, %c8_i32_87 : i32
    %313 = tpu.assume_multiple %312, 8 : i32
    %314 = arith.index_cast %313 : i32 to index
    %c0_88 = arith.constant 0 : index
    %315 = vector.load %arg11[%314, %c0_88] : memref<64x128xf32, #tpu.memory_space<vmem>>, vector<8x128xf32>
    %cst_89 = arith.constant dense<0.000000e+00> : vector<8x128xf32>
    %316 = tpu.matmul %309, %214, %cst_89 {dimension_numbers = #tpu.dot_dimension_numbers<[1], [0], [0], [1], [0, 0, 1, 1], [], []>} : vector<8x32xf32>, vector<32x128xf32>, vector<8x128xf32> -> vector<8x128xf32>
    %317 = arith.addf %315, %316 : vector<8x128xf32>
    %318 = math.tanh %317 : vector<8x128xf32>
    %319 = arith.negf %317 : vector<8x128xf32>
    %320 = math.exp %319 : vector<8x128xf32>
    %cst_90 = arith.constant 1.000000e+00 : f32
    %321 = vector.broadcast %cst_90 : f32 to vector<8x128xf32>
    %322 = arith.addf %321, %320 : vector<8x128xf32>
    %323 = arith.divf %321, %322 : vector<8x128xf32>
    %324 = arith.select %12, %318, %323 : vector<8x128xi1>, vector<8x128xf32>
    %325 = vector.extract_strided_slice %324 {offsets = [0, 0], sizes = [8, 32], strides = [1, 1]} : vector<8x128xf32> to vector<8x32xf32>
    %326 = vector.extract_strided_slice %324 {offsets = [0, 32], sizes = [8, 32], strides = [1, 1]} : vector<8x128xf32> to vector<8x32xf32>
    %327 = vector.extract_strided_slice %324 {offsets = [0, 64], sizes = [8, 32], strides = [1, 1]} : vector<8x128xf32> to vector<8x32xf32>
    %328 = vector.extract_strided_slice %324 {offsets = [0, 96], sizes = [8, 32], strides = [1, 1]} : vector<8x128xf32> to vector<8x32xf32>
    %329 = arith.mulf %326, %307 : vector<8x32xf32>
    %330 = arith.mulf %325, %327 : vector<8x32xf32>
    %331 = arith.addf %329, %330 : vector<8x32xf32>
    %332 = math.tanh %331 : vector<8x32xf32>
    %333 = arith.mulf %328, %332 : vector<8x32xf32>
    %334 = arith.index_cast %313 : i32 to index
    %c0_91 = arith.constant 0 : index
    %335 = vector.load %arg13[%334, %c0_91] : memref<64x32xf32, #tpu.memory_space<vmem>>, vector<8x32xf32>
    tpu.vector_store %arg13[%334, %c0_91], %333 {strides = array<i32>} : memref<64x32xf32, #tpu.memory_space<vmem>>, vector<8x32xf32>,
    %c5_i32_92 = arith.constant 5 : i32
    %c8_i32_93 = arith.constant 8 : i32
    %336 = arith.muli %c5_i32_92, %c8_i32_93 : i32
    %337 = tpu.assume_multiple %336, 8 : i32
    %338 = arith.index_cast %337 : i32 to index
    %c0_94 = arith.constant 0 : index
    %339 = vector.load %arg11[%338, %c0_94] : memref<64x128xf32, #tpu.memory_space<vmem>>, vector<8x128xf32>
    %cst_95 = arith.constant dense<0.000000e+00> : vector<8x128xf32>
    %340 = tpu.matmul %333, %214, %cst_95 {dimension_numbers = #tpu.dot_dimension_numbers<[1], [0], [0], [1], [0, 0, 1, 1], [], []>} : vector<8x32xf32>, vector<32x128xf32>, vector<8x128xf32> -> vector<8x128xf32>
    %341 = arith.addf %339, %340 : vector<8x128xf32>
    %342 = math.tanh %341 : vector<8x128xf32>
    %343 = arith.negf %341 : vector<8x128xf32>
    %344 = math.exp %343 : vector<8x128xf32>
    %cst_96 = arith.constant 1.000000e+00 : f32
    %345 = vector.broadcast %cst_96 : f32 to vector<8x128xf32>
    %346 = arith.addf %345, %344 : vector<8x128xf32>
    %347 = arith.divf %345, %346 : vector<8x128xf32>
    %348 = arith.select %12, %342, %347 : vector<8x128xi1>, vector<8x128xf32>
    %349 = vector.extract_strided_slice %348 {offsets = [0, 0], sizes = [8, 32], strides = [1, 1]} : vector<8x128xf32> to vector<8x32xf32>
    %350 = vector.extract_strided_slice %348 {offsets = [0, 32], sizes = [8, 32], strides = [1, 1]} : vector<8x128xf32> to vector<8x32xf32>
    %351 = vector.extract_strided_slice %348 {offsets = [0, 64], sizes = [8, 32], strides = [1, 1]} : vector<8x128xf32> to vector<8x32xf32>
    %352 = vector.extract_strided_slice %348 {offsets = [0, 96], sizes = [8, 32], strides = [1, 1]} : vector<8x128xf32> to vector<8x32xf32>
    %353 = arith.mulf %350, %331 : vector<8x32xf32>
    %354 = arith.mulf %349, %351 : vector<8x32xf32>
    %355 = arith.addf %353, %354 : vector<8x32xf32>
    %356 = math.tanh %355 : vector<8x32xf32>
    %357 = arith.mulf %352, %356 : vector<8x32xf32>
    %358 = arith.index_cast %337 : i32 to index
    %c0_97 = arith.constant 0 : index
    %359 = vector.load %arg13[%358, %c0_97] : memref<64x32xf32, #tpu.memory_space<vmem>>, vector<8x32xf32>
    tpu.vector_store %arg13[%358, %c0_97], %357 {strides = array<i32>} : memref<64x32xf32, #tpu.memory_space<vmem>>, vector<8x32xf32>,
    %c6_i32_98 = arith.constant 6 : i32
    %c8_i32_99 = arith.constant 8 : i32
    %360 = arith.muli %c6_i32_98, %c8_i32_99 : i32
    %361 = tpu.assume_multiple %360, 8 : i32
    %362 = arith.index_cast %361 : i32 to index
    %c0_100 = arith.constant 0 : index
    %363 = vector.load %arg11[%362, %c0_100] : memref<64x128xf32, #tpu.memory_space<vmem>>, vector<8x128xf32>
    %cst_101 = arith.constant dense<0.000000e+00> : vector<8x128xf32>
    %364 = tpu.matmul %357, %214, %cst_101 {dimension_numbers = #tpu.dot_dimension_numbers<[1], [0], [0], [1], [0, 0, 1, 1], [], []>} : vector<8x32xf32>, vector<32x128xf32>, vector<8x128xf32> -> vector<8x128xf32>
    %365 = arith.addf %363, %364 : vector<8x128xf32>
    %366 = math.tanh %365 : vector<8x128xf32>
    %367 = arith.negf %365 : vector<8x128xf32>
    %368 = math.exp %367 : vector<8x128xf32>
    %cst_102 = arith.constant 1.000000e+00 : f32
    %369 = vector.broadcast %cst_102 : f32 to vector<8x128xf32>
    %370 = arith.addf %369, %368 : vector<8x128xf32>
    %371 = arith.divf %369, %370 : vector<8x128xf32>
    %372 = arith.select %12, %366, %371 : vector<8x128xi1>, vector<8x128xf32>
    %373 = vector.extract_strided_slice %372 {offsets = [0, 0], sizes = [8, 32], strides = [1, 1]} : vector<8x128xf32> to vector<8x32xf32>
    %374 = vector.extract_strided_slice %372 {offsets = [0, 32], sizes = [8, 32], strides = [1, 1]} : vector<8x128xf32> to vector<8x32xf32>
    %375 = vector.extract_strided_slice %372 {offsets = [0, 64], sizes = [8, 32], strides = [1, 1]} : vector<8x128xf32> to vector<8x32xf32>
    %376 = vector.extract_strided_slice %372 {offsets = [0, 96], sizes = [8, 32], strides = [1, 1]} : vector<8x128xf32> to vector<8x32xf32>
    %377 = arith.mulf %374, %355 : vector<8x32xf32>
    %378 = arith.mulf %373, %375 : vector<8x32xf32>
    %379 = arith.addf %377, %378 : vector<8x32xf32>
    %380 = math.tanh %379 : vector<8x32xf32>
    %381 = arith.mulf %376, %380 : vector<8x32xf32>
    %382 = arith.index_cast %361 : i32 to index
    %c0_103 = arith.constant 0 : index
    %383 = vector.load %arg13[%382, %c0_103] : memref<64x32xf32, #tpu.memory_space<vmem>>, vector<8x32xf32>
    tpu.vector_store %arg13[%382, %c0_103], %381 {strides = array<i32>} : memref<64x32xf32, #tpu.memory_space<vmem>>, vector<8x32xf32>,
    %c7_i32_104 = arith.constant 7 : i32
    %c8_i32_105 = arith.constant 8 : i32
    %384 = arith.muli %c7_i32_104, %c8_i32_105 : i32
    %385 = tpu.assume_multiple %384, 8 : i32
    %386 = arith.index_cast %385 : i32 to index
    %c0_106 = arith.constant 0 : index
    %387 = vector.load %arg11[%386, %c0_106] : memref<64x128xf32, #tpu.memory_space<vmem>>, vector<8x128xf32>
    %cst_107 = arith.constant dense<0.000000e+00> : vector<8x128xf32>
    %388 = tpu.matmul %381, %214, %cst_107 {dimension_numbers = #tpu.dot_dimension_numbers<[1], [0], [0], [1], [0, 0, 1, 1], [], []>} : vector<8x32xf32>, vector<32x128xf32>, vector<8x128xf32> -> vector<8x128xf32>
    %389 = arith.addf %387, %388 : vector<8x128xf32>
    %390 = math.tanh %389 : vector<8x128xf32>
    %391 = arith.negf %389 : vector<8x128xf32>
    %392 = math.exp %391 : vector<8x128xf32>
    %cst_108 = arith.constant 1.000000e+00 : f32
    %393 = vector.broadcast %cst_108 : f32 to vector<8x128xf32>
    %394 = arith.addf %393, %392 : vector<8x128xf32>
    %395 = arith.divf %393, %394 : vector<8x128xf32>
    %396 = arith.select %12, %390, %395 : vector<8x128xi1>, vector<8x128xf32>
    %397 = vector.extract_strided_slice %396 {offsets = [0, 0], sizes = [8, 32], strides = [1, 1]} : vector<8x128xf32> to vector<8x32xf32>
    %398 = vector.extract_strided_slice %396 {offsets = [0, 32], sizes = [8, 32], strides = [1, 1]} : vector<8x128xf32> to vector<8x32xf32>
    %399 = vector.extract_strided_slice %396 {offsets = [0, 64], sizes = [8, 32], strides = [1, 1]} : vector<8x128xf32> to vector<8x32xf32>
    %400 = vector.extract_strided_slice %396 {offsets = [0, 96], sizes = [8, 32], strides = [1, 1]} : vector<8x128xf32> to vector<8x32xf32>
    %401 = arith.mulf %398, %379 : vector<8x32xf32>
    %402 = arith.mulf %397, %399 : vector<8x32xf32>
    %403 = arith.addf %401, %402 : vector<8x32xf32>
    %404 = math.tanh %403 : vector<8x32xf32>
    %405 = arith.mulf %400, %404 : vector<8x32xf32>
    %406 = arith.index_cast %385 : i32 to index
    %c0_109 = arith.constant 0 : index
    %407 = vector.load %arg13[%406, %c0_109] : memref<64x32xf32, #tpu.memory_space<vmem>>, vector<8x32xf32>
    tpu.vector_store %arg13[%406, %c0_109], %405 {strides = array<i32>} : memref<64x32xf32, #tpu.memory_space<vmem>>, vector<8x32xf32>,
    %c8_i32_110 = arith.constant 8 : i32
    %c0_111 = arith.constant 0 : index
    %c0_112 = arith.constant 0 : index
    %408 = vector.load %arg13[%c0_111, %c0_112] : memref<64x32xf32, #tpu.memory_space<vmem>>, vector<64x32xf32>
    %c0_113 = arith.constant 0 : index
    %c0_114 = arith.constant 0 : index
    %409 = vector.load %arg7[%c0_113, %c0_114] : memref<32x32xf32, #tpu.memory_space<vmem>>, vector<32x32xf32>
    %cst_115 = arith.constant dense<0.000000e+00> : vector<64x32xf32>
    %410 = tpu.matmul %408, %409, %cst_115 {dimension_numbers = #tpu.dot_dimension_numbers<[1], [0], [0], [1], [0, 0, 1, 1], [], []>} : vector<64x32xf32>, vector<32x32xf32>, vector<64x32xf32> -> vector<64x32xf32>
    %c0_116 = arith.constant 0 : index
    %c0_117 = arith.constant 0 : index
    %411 = vector.load %arg8[%c0_116, %c0_117] : memref<1x32xf32, #tpu.memory_space<vmem>>, vector<1x32xf32>
    %412 = vector.broadcast %411 : vector<1x32xf32> to vector<64x32xf32>
    %413 = arith.addf %410, %412 : vector<64x32xf32>
    %c0_118 = arith.constant 0 : index
    %c0_119 = arith.constant 0 : index
    %414 = vector.load %arg9[%c0_118, %c0_119] : memref<64x32xf32, #tpu.memory_space<vmem>>, vector<64x32xf32>
    tpu.vector_store %arg9[%c0_118, %c0_119], %413 {strides = array<i32>} : memref<64x32xf32, #tpu.memory_space<vmem>>, vector<64x32xf32>,
    return
  }
}

</mosaic_0001>

<llo_original>
// kernel: tpu_custom_call.1
$region0: #{tpu_custom_call.1}
  #allocation0 [shape = 'u32[]', space=smem, size = 0x4, offset = 0x4, fixed_abs, tag = 'smem constant byte address 0x4 - core index']
  #allocation1 [shape = 'u32[144,128]{1,0:T(1,128)}', space=vmem, size = 0x12000, scoped, tag = 'internal scratch']
  #allocation2 [shape = 'f32[64,128]{1,0:T(8,128)}', space=vmem, size = 0x8000, scoped, tag = 'scratch operand']
  #allocation3 [shape = 'f32[64,128]{1,0:T(8,128)}', space=vmem, size = 0x8000, scoped, tag = 'scratch operand']
  #allocation4 [shape = 'f32[64,32]{1,0:T(8,128)}', space=vmem, size = 0x8000, scoped, tag = 'scratch operand']
  #allocation5 [shape = 'f32[64,32]{1,0:T(8,128)}', space=vmem, size = 0x8000, scoped, tag = 'scratch operand']
  %s0 = inlined_call_operand.hbm [shape: f32[64,32], index: 0, kind: input, shape index: {}]
  %s1 = inlined_call_operand.hbm [shape: f32[32,128], index: 1, kind: input, shape index: {}]
  %s2 = inlined_call_operand.hbm [shape: f32[32,128], index: 2, kind: input, shape index: {}]
  %s3 = inlined_call_operand.hbm [shape: f32[1,128], index: 3, kind: input, shape index: {}]
  %s4 = inlined_call_operand.hbm [shape: f32[32,128], index: 4, kind: input, shape index: {}]
  %s5 = inlined_call_operand.hbm [shape: f32[32,128], index: 5, kind: input, shape index: {}]
  %s6 = inlined_call_operand.hbm [shape: f32[1,128], index: 6, kind: input, shape index: {}]
  %s7 = inlined_call_operand.hbm [shape: f32[32,32], index: 7, kind: input, shape index: {}]
  %s8 = inlined_call_operand.hbm [shape: f32[1,32], index: 8, kind: input, shape index: {}]
  %s9 = inlined_call_operand.hbm [shape: f32[64,32], index: 9, kind: output, shape index: {}]
  %s10 = sld [smem:[#allocation0]]
  $region82: #{tpu_custom_call.1} parent=0
    _
  %s12 = ssub.s32 1, %s10
  %s13 = scalar_select 0, %s12, %s10
  $region1: #{tpu_custom_call.1} parent=0
    #allocation6 [shape = 'u8[32768]{0}', space=vmem, size = 0x8000, scoped, tag = 'input window, operand 0, single buffered']
    #allocation7 [shape = 's32[1]{0}', space=sflag, size = 0x4, scoped, tag = 'scoped memory for tpu_custom_call.1']
    #allocation8 [shape = 's32[1]{0}', space=sflag, size = 0x4, scoped, tag = 'scoped memory for tpu_custom_call.1']
    #allocation9 [shape = 'u8[16384]{0}', space=vmem, size = 0x4000, scoped, tag = 'input window, operand 1, single buffered']
    #allocation10 [shape = 's32[1]{0}', space=sflag, size = 0x4, scoped, tag = 'scoped memory for tpu_custom_call.1']
    #allocation11 [shape = 'u8[16384]{0}', space=vmem, size = 0x4000, scoped, tag = 'input window, operand 2, single buffered']
    #allocation12 [shape = 'u8[512]{0}', space=vmem, size = 0x400, scoped, tag = 'input window, operand 3, single buffered']
    #allocation13 [shape = 's32[1]{0}', space=sflag, size = 0x4, scoped, tag = 'scoped memory for tpu_custom_call.1']
    #allocation14 [shape = 'u8[16384]{0}', space=vmem, size = 0x4000, scoped, tag = 'input window, operand 4, single buffered']
    #allocation15 [shape = 'u8[16384]{0}', space=vmem, size = 0x4000, scoped, tag = 'input window, operand 5, single buffered']
    #allocation16 [shape = 's32[1]{0}', space=sflag, size = 0x4, scoped, tag = 'scoped memory for tpu_custom_call.1']
    #allocation17 [shape = 'u8[512]{0}', space=vmem, size = 0x400, scoped, tag = 'input window, operand 6, single buffered']
    #allocation18 [shape = 'u8[16384]{0}', space=vmem, size = 0x4000, scoped, tag = 'input window, operand 7, single buffered']
    #allocation19 [shape = 's32[1]{0}', space=sflag, size = 0x4, scoped, tag = 'scoped memory for tpu_custom_call.1']
    #allocation20 [shape = 'u8[512]{0}', space=vmem, size = 0x400, scoped, tag = 'input window, operand 8, single buffered']
    #allocation21 [shape = 'u8[32768]{0}', space=vmem, size = 0x8000, scoped, tag = 'output window, operand 0, single buffered']
    %14 = vsyncpa [#allocation7], 0
    %15 = vsyncpa [#allocation10], 0
    %16 = vsyncpa [#allocation13], 0
    %17 = vsyncpa [#allocation16], 0
    %18 = vsyncpa [#allocation19], 0
    %19 = vsyncpa [#allocation8], 0
    // Predicated region
    $region2: #{tpu_custom_call.1} parent=1 // pred_check
      _
    $region3: #{tpu_custom_call.1} parent=1 // pred_check_branch
      %21 = sbr.rel (0) target = $region5
    $region4: #{tpu_custom_call.1} parent=1 // pred_region
      %s23 = ssub.s32 1024, 1024
      %24 = vsyncadd [#allocation7], %s23
      %s25 = sshll.u32 [#allocation6], 4
      %s26 = int_to_ptr.vmem [resolvable:$true] %s25
      %31 = dma.hbm_to_vmem [thread:$0]  %s0, 1024, %s26, [#allocation7], 128, 128, 8
    $region5: #{tpu_custom_call.1} parent=1 // pred_fallthru
      _
    // Predicated region
    $region6: #{tpu_custom_call.1} parent=1 // pred_check
      _
    $region7: #{tpu_custom_call.1} parent=1 // pred_check_branch
      %33 = sbr.rel (0) target = $region9
    $region8: #{tpu_custom_call.1} parent=1 // pred_region
      %s35 = ssub.s32 512, 512
      %36 = vsyncadd [#allocation10], %s35
      %s37 = sshll.u32 [#allocation9], 4
      %s38 = int_to_ptr.vmem [resolvable:$true] %s37
      %43 = dma.hbm_to_vmem [thread:$0]  %s1, 512, %s38, [#allocation10], 128, 128, 8
    $region9: #{tpu_custom_call.1} parent=1 // pred_fallthru
      _
    // Predicated region
    $region10: #{tpu_custom_call.1} parent=1 // pred_check
      _
    $region11: #{tpu_custom_call.1} parent=1 // pred_check_branch
      %45 = sbr.rel (0) target = $region13
    $region12: #{tpu_custom_call.1} parent=1 // pred_region
      %s47 = ssub.s32 512, 512
      %48 = vsyncadd [#allocation10], %s47
      %s49 = sshll.u32 [#allocation11], 4
      %s50 = int_to_ptr.vmem [resolvable:$true] %s49
      %55 = dma.hbm_to_vmem [thread:$0]  %s2, 512, %s50, [#allocation10], 128, 128, 8
    $region13: #{tpu_custom_call.1} parent=1 // pred_fallthru
      _
    // Predicated region
    $region14: #{tpu_custom_call.1} parent=1 // pred_check
      _
    $region15: #{tpu_custom_call.1} parent=1 // pred_check_branch
      %57 = sbr.rel (0) target = $region17
    $region16: #{tpu_custom_call.1} parent=1 // pred_region
      %s59 = ssub.s32 16, 16
      %60 = vsyncadd [#allocation13], %s59
      %s62 = sshll.u32 [#allocation12], 4
      %s63 = int_to_ptr.vmem [resolvable:$true] %s62
      %65 = dma.hbm_to_vmem [thread:$0]  %s3, 16, %s63, [#allocation13]
    $region17: #{tpu_custom_call.1} parent=1 // pred_fallthru
      _
    // Predicated region
    $region18: #{tpu_custom_call.1} parent=1 // pred_check
      _
    $region19: #{tpu_custom_call.1} parent=1 // pred_check_branch
      %67 = sbr.rel (0) target = $region21
    $region20: #{tpu_custom_call.1} parent=1 // pred_region
      %s69 = ssub.s32 512, 512
      %70 = vsyncadd [#allocation13], %s69
      %s71 = sshll.u32 [#allocation14], 4
      %s72 = int_to_ptr.vmem [resolvable:$true] %s71
      %77 = dma.hbm_to_vmem [thread:$0]  %s4, 512, %s72, [#allocation13], 128, 128, 8
    $region21: #{tpu_custom_call.1} parent=1 // pred_fallthru
      _
    // Predicated region
    $region22: #{tpu_custom_call.1} parent=1 // pred_check
      _
    $region23: #{tpu_custom_call.1} parent=1 // pred_check_branch
      %79 = sbr.rel (0) target = $region25
    $region24: #{tpu_custom_call.1} parent=1 // pred_region
      %s81 = ssub.s32 512, 512
      %82 = vsyncadd [#allocation16], %s81
      %s83 = sshll.u32 [#allocation15], 4
      %s84 = int_to_ptr.vmem [resolvable:$true] %s83
      %89 = dma.hbm_to_vmem [thread:$0]  %s5, 512, %s84, [#allocation16], 128, 128, 8
    $region25: #{tpu_custom_call.1} parent=1 // pred_fallthru
      _
    // Predicated region
    $region26: #{tpu_custom_call.1} parent=1 // pred_check
      _
    $region27: #{tpu_custom_call.1} parent=1 // pred_check_branch
      %91 = sbr.rel (0) target = $region29
    $region28: #{tpu_custom_call.1} parent=1 // pred_region
      %s93 = ssub.s32 16, 16
      %94 = vsyncadd [#allocation16], %s93
      %s96 = sshll.u32 [#allocation17], 4
      %s97 = int_to_ptr.vmem [resolvable:$true] %s96
      %99 = dma.hbm_to_vmem [thread:$0]  %s6, 16, %s97, [#allocation16]
    $region29: #{tpu_custom_call.1} parent=1 // pred_fallthru
      _
    // Predicated region
    $region30: #{tpu_custom_call.1} parent=1 // pred_check
      _
    $region31: #{tpu_custom_call.1} parent=1 // pred_check_branch
      %101 = sbr.rel (0) target = $region33
    $region32: #{tpu_custom_call.1} parent=1 // pred_region
      %s103 = ssub.s32 512, 512
      %104 = vsyncadd [#allocation19], %s103
      %s105 = sshll.u32 [#allocation18], 4
      %s106 = int_to_ptr.vmem [resolvable:$true] %s105
      %111 = dma.hbm_to_vmem [thread:$0]  %s7, 512, %s106, [#allocation19], 128, 128, 8
    $region33: #{tpu_custom_call.1} parent=1 // pred_fallthru
      _
    // Predicated region
    $region34: #{tpu_custom_call.1} parent=1 // pred_check
      _
    $region35: #{tpu_custom_call.1} parent=1 // pred_check_branch
      %113 = sbr.rel (0) target = $region37
    $region36: #{tpu_custom_call.1} parent=1 // pred_region
      %s115 = ssub.s32 16, 16
      %116 = vsyncadd [#allocation19], %s115
      %s118 = sshll.u32 [#allocation20], 4
      %s119 = int_to_ptr.vmem [resolvable:$true] %s118
      %121 = dma.hbm_to_vmem [thread:$0]  %s8, 16, %s119, [#allocation19]
    $region37: #{tpu_custom_call.1} parent=1 // pred_fallthru
      _
    // Predicated region
    $region38: #{tpu_custom_call.1} parent=1 // pred_check
      _
    $region39: #{tpu_custom_call.1} parent=1 // pred_check_branch
      %123 = sbr.rel (0) target = $region41
    $region40: #{tpu_custom_call.1} parent=1 // pred_region
      %124 = dma.done [#allocation7], 1024
    $region41: #{tpu_custom_call.1} parent=1 // pred_fallthru
      _
    // Predicated region
    $region42: #{tpu_custom_call.1} parent=1 // pred_check
      _
    $region43: #{tpu_custom_call.1} parent=1 // pred_check_branch
      %126 = sbr.rel (0) target = $region45
    $region44: #{tpu_custom_call.1} parent=1 // pred_region
      %127 = dma.done [#allocation10], 512
    $region45: #{tpu_custom_call.1} parent=1 // pred_fallthru
      _
    // Predicated region
    $region46: #{tpu_custom_call.1} parent=1 // pred_check
      _
    $region47: #{tpu_custom_call.1} parent=1 // pred_check_branch
      %129 = sbr.rel (0) target = $region49
    $region48: #{tpu_custom_call.1} parent=1 // pred_region
      %130 = dma.done [#allocation10], 512
    $region49: #{tpu_custom_call.1} parent=1 // pred_fallthru
      _
    // Predicated region
    $region50: #{tpu_custom_call.1} parent=1 // pred_check
      _
    $region51: #{tpu_custom_call.1} parent=1 // pred_check_branch
      %132 = sbr.rel (0) target = $region53
    $region52: #{tpu_custom_call.1} parent=1 // pred_region
      %133 = dma.done [#allocation13], 16
    $region53: #{tpu_custom_call.1} parent=1 // pred_fallthru
      _
    // Predicated region
    $region54: #{tpu_custom_call.1} parent=1 // pred_check
      _
    $region55: #{tpu_custom_call.1} parent=1 // pred_check_branch
      %135 = sbr.rel (0) target = $region57
    $region56: #{tpu_custom_call.1} parent=1 // pred_region
      %136 = dma.done [#allocation13], 512
    $region57: #{tpu_custom_call.1} parent=1 // pred_fallthru
      _
    // Predicated region
    $region58: #{tpu_custom_call.1} parent=1 // pred_check
      _
    $region59: #{tpu_custom_call.1} parent=1 // pred_check_branch
      %138 = sbr.rel (0) target = $region61
    $region60: #{tpu_custom_call.1} parent=1 // pred_region
      %139 = dma.done [#allocation16], 512
    $region61: #{tpu_custom_call.1} parent=1 // pred_fallthru
      _
    // Predicated region
    $region62: #{tpu_custom_call.1} parent=1 // pred_check
      _
    $region63: #{tpu_custom_call.1} parent=1 // pred_check_branch
      %141 = sbr.rel (0) target = $region65
    $region64: #{tpu_custom_call.1} parent=1 // pred_region
      %142 = dma.done [#allocation16], 16
    $region65: #{tpu_custom_call.1} parent=1 // pred_fallthru
      _
    // Predicated region
    $region66: #{tpu_custom_call.1} parent=1 // pred_check
      _
    $region67: #{tpu_custom_call.1} parent=1 // pred_check_branch
      %144 = sbr.rel (0) target = $region69
    $region68: #{tpu_custom_call.1} parent=1 // pred_region
      %145 = dma.done [#allocation19], 512
    $region69: #{tpu_custom_call.1} parent=1 // pred_fallthru
      _
    // Predicated region
    $region70: #{tpu_custom_call.1} parent=1 // pred_check
      _
    $region71: #{tpu_custom_call.1} parent=1 // pred_check_branch
      %147 = sbr.rel (0) target = $region73
    $region72: #{tpu_custom_call.1} parent=1 // pred_region
      %148 = dma.done [#allocation19], 16
    $region73: #{tpu_custom_call.1} parent=1 // pred_fallthru
      _
    %v149 = vld [vmem:[#allocation6] sm:$0xff]
    %v150 = vld [vmem:[#allocation6 + $0x8] sm:$0xff]
    %v151 = vld [vmem:[#allocation6 + $0x10] sm:$0xff]
    %v152 = vld [vmem:[#allocation6 + $0x18] sm:$0xff]
    %v153 = vld [vmem:[#allocation6 + $0x20] sm:$0xff]
    %v154 = vld [vmem:[#allocation6 + $0x28] sm:$0xff]
    %v155 = vld [vmem:[#allocation6 + $0x30] sm:$0xff]
    %v156 = vld [vmem:[#allocation6 + $0x38] sm:$0xff]
    %v157 = vld [vmem:[#allocation9] sm:$0xff]
    %v158 = vld [vmem:[#allocation9 + $0x8] sm:$0xff]
    %v159 = vld [vmem:[#allocation9 + $0x10] sm:$0xff]
    %v160 = vld [vmem:[#allocation9 + $0x18] sm:$0xff]
    %v161 = vld [vmem:[#allocation12] sm:$0x1]
    %v163 = vlaneseq
    %v164 = vshrl.u32 %v163, 7
    %v165 = vsub.s32 0, %v164
    %v166 = vrot.slane %v161, %v165
    %vm168 = vcmask 261120
    %v170 = vsel %vm168, %v149, 0
    %v173 = vsel %vm168, %v150, 0
    %v176 = vsel %vm168, %v151, 0
    %v179 = vsel %vm168, %v152, 0
    %v182 = vsel %vm168, %v153, 0
    %v185 = vsel %vm168, %v154, 0
    %v188 = vsel %vm168, %v155, 0
    %v191 = vsel %vm168, %v156, 0
    %193 = vmatprep.subr.mxu0 0.0
    %194 = vmatpush1.msra.mxu0 %v157
    %195 = vmatprep.subr.mxu0 0.0
    %196 = vmatpush1.msra.mxu0 %v158
    %197 = vmatprep.subr.mxu0 0.0
    %198 = vmatpush1.msra.mxu0 %v159
    %199 = vmatprep.subr.mxu0 0.0
    %200 = vmatpush1.msra.mxu0 %v160
    %201 = vmatprep.subr.mxu0 0.0
    %202 = vmatpush1.msra.mxu0 0.0
    %203 = vmatprep.subr.mxu0 0.0
    %204 = vmatpush1.msra.mxu0 0.0
    %205 = vmatprep.subr.mxu0 0.0
    %206 = vmatpush1.msra.mxu0 0.0
    %207 = vmatprep.subr.mxu0 0.0
    %208 = vmatpush1.msra.mxu0 0.0
    %209 = vmatprep.subr.mxu0 0.0
    %210 = vmatpush1.msra.mxu0 0.0
    %211 = vmatprep.subr.mxu0 0.0
    %212 = vmatpush1.msra.mxu0 0.0
    %213 = vmatprep.subr.mxu0 0.0
    %214 = vmatpush1.msra.mxu0 0.0
    %215 = vmatprep.subr.mxu0 0.0
    %216 = vmatpush1.msra.mxu0 0.0
    %217 = vmatprep.subr.mxu0 0.0
    %218 = vmatpush1.msra.mxu0 0.0
    %219 = vmatprep.subr.mxu0 0.0
    %220 = vmatpush1.msra.mxu0 0.0
    %221 = vmatprep.subr.mxu0 0.0
    %222 = vmatpush1.msra.mxu0 0.0
    %223 = vmatprep.subr.mxu0 0.0
    %224 = vmatpush1.msra.mxu0 0.0
    %225 = vmatprep.subr.mxu0 0.0
    %226 = vmatpush1.msra.mxu0 0.0
    %227 = vmatprep.subr.mxu0 0.0
    %228 = vmatpush1.msra.mxu0 0.0
    %229 = vmatprep.subr.mxu0 0.0
    %230 = vmatpush1.msra.mxu0 0.0
    %231 = vmatprep.subr.mxu0 0.0
    %232 = vmatpush1.msra.mxu0 0.0
    %233 = vmatprep.subr.mxu0 0.0
    %234 = vmatpush1.msra.mxu0 0.0
    %235 = vmatprep.subr.mxu0 0.0
    %236 = vmatpush1.msra.mxu0 0.0
    %237 = vmatprep.subr.mxu0 0.0
    %238 = vmatpush1.msra.mxu0 0.0
    %239 = vmatprep.subr.mxu0 0.0
    %240 = vmatpush1.msra.mxu0 0.0
    %241 = vmatprep.subr.mxu0 0.0
    %242 = vmatpush1.msra.mxu0 0.0
    %243 = vmatprep.subr.mxu0 0.0
    %244 = vmatpush1.msra.mxu0 0.0
    %245 = vmatprep.subr.mxu0 0.0
    %246 = vmatpush1.msra.mxu0 0.0
    %247 = vmatprep.subr.mxu0 0.0
    %248 = vmatpush1.msra.mxu0 0.0
    %249 = vmatprep.subr.mxu0 0.0
    %250 = vmatpush1.msra.mxu0 0.0
    %251 = vmatprep.subr.mxu0 0.0
    %252 = vmatpush1.msra.mxu0 0.0
    %253 = vmatprep.subr.mxu0 0.0
    %254 = vmatpush1.msra.mxu0 0.0
    %255 = vmatprep.subr.mxu0 0.0
    %256 = vmatpush1.msra.mxu0 0.0
    %257 = vmatprep.mubr.f32.mxu0 0.0
    %258 = vmatmul.mubr.f32.gmra.mrb[0].mxu0 %v170
    %v259 = vpop.f32.mrb[0].mxu0
    %v260 = vadd.f32 %v166, %v259
    %v261 = vpop.f32.mrb[0].mxu0
    %262 = vmatprep.mubr.f32.mxu0 0.0
    %263 = vmatmul.mubr.f32.gmra.mrb[0].mxu0 %v173
    %v264 = vpop.f32.mrb[0].mxu0
    %v265 = vadd.f32 %v166, %v264
    %v266 = vpop.f32.mrb[0].mxu0
    %267 = vmatprep.mubr.f32.mxu0 0.0
    %268 = vmatmul.mubr.f32.gmra.mrb[0].mxu0 %v176
    %v269 = vpop.f32.mrb[0].mxu0
    %v270 = vadd.f32 %v166, %v269
    %v271 = vpop.f32.mrb[0].mxu0
    %272 = vmatprep.mubr.f32.mxu0 0.0
    %273 = vmatmul.mubr.f32.gmra.mrb[0].mxu0 %v179
    %v274 = vpop.f32.mrb[0].mxu0
    %v275 = vadd.f32 %v166, %v274
    %v276 = vpop.f32.mrb[0].mxu0
    %277 = vmatprep.mubr.f32.mxu0 0.0
    %278 = vmatmul.mubr.f32.gmra.mrb[0].mxu0 %v182
    %v279 = vpop.f32.mrb[0].mxu0
    %v280 = vadd.f32 %v166, %v279
    %v281 = vpop.f32.mrb[0].mxu0
    %282 = vmatprep.mubr.f32.mxu0 0.0
    %283 = vmatmul.mubr.f32.gmra.mrb[0].mxu0 %v185
    %v284 = vpop.f32.mrb[0].mxu0
    %v285 = vadd.f32 %v166, %v284
    %v286 = vpop.f32.mrb[0].mxu0
    %287 = vmatprep.mubr.f32.mxu0 0.0
    %288 = vmatmul.mubr.f32.gmra.mrb[0].mxu0 %v188
    %v289 = vpop.f32.mrb[0].mxu0
    %v290 = vadd.f32 %v166, %v289
    %v291 = vpop.f32.mrb[0].mxu0
    %292 = vmatprep.mubr.f32.mxu0 0.0
    %293 = vmatmul.mubr.f32.gmra.mrb[0].mxu0 %v191
    %v294 = vpop.f32.mrb[0].mxu0
    %v295 = vadd.f32 %v166, %v294
    %v296 = vpop.f32.mrb[0].mxu0
    %297 = vdwg.mxu0
    %298 = vst [vmem:[#allocation2] sm:$0xff] %v260
    %299 = vst [vmem:[#allocation2 + $0x8] sm:$0xff] %v265
    %300 = vst [vmem:[#allocation2 + $0x10] sm:$0xff] %v270
    %301 = vst [vmem:[#allocation2 + $0x18] sm:$0xff] %v275
    %302 = vst [vmem:[#allocation2 + $0x20] sm:$0xff] %v280
    %303 = vst [vmem:[#allocation2 + $0x28] sm:$0xff] %v285
    %304 = vst [vmem:[#allocation2 + $0x30] sm:$0xff] %v290
    %305 = vst [vmem:[#allocation2 + $0x38] sm:$0xff] %v295
    %v306 = vlaneseq
    %v307 = vand.u32 %v306, 127
    %vm308 = vcmp.ge.s32.totalorder %v307, 64
    %vm309 = vcmp.lt.s32.totalorder %v307, 96
    %vm310 = vmand %vm308, %vm309
    %v311 = vld [vmem:[#allocation11] sm:$0xff]
    %v312 = vld [vmem:[#allocation11 + $0x8] sm:$0xff]
    %v313 = vld [vmem:[#allocation11 + $0x10] sm:$0xff]
    %v314 = vld [vmem:[#allocation11 + $0x18] sm:$0xff]
    %v315 = vld [vmem:[#allocation2] sm:$0xff]
    %v317 = vsel %vm168, 0.0, 0
    %319 = vmatprep.subr.mxu0 0.0
    %320 = vmatpush1.msra.mxu0 %v311
    %321 = vmatprep.subr.mxu0 0.0
    %322 = vmatpush1.msra.mxu0 %v312
    %323 = vmatprep.subr.mxu0 0.0
    %324 = vmatpush1.msra.mxu0 %v313
    %325 = vmatprep.subr.mxu0 0.0
    %326 = vmatpush1.msra.mxu0 %v314
    %327 = vmatprep.subr.mxu0 0.0
    %328 = vmatpush1.msra.mxu0 0.0
    %329 = vmatprep.subr.mxu0 0.0
    %330 = vmatpush1.msra.mxu0 0.0
    %331 = vmatprep.subr.mxu0 0.0
    %332 = vmatpush1.msra.mxu0 0.0
    %333 = vmatprep.subr.mxu0 0.0
    %334 = vmatpush1.msra.mxu0 0.0
    %335 = vmatprep.subr.mxu0 0.0
    %336 = vmatpush1.msra.mxu0 0.0
    %337 = vmatprep.subr.mxu0 0.0
    %338 = vmatpush1.msra.mxu0 0.0
    %339 = vmatprep.subr.mxu0 0.0
    %340 = vmatpush1.msra.mxu0 0.0
    %341 = vmatprep.subr.mxu0 0.0
    %342 = vmatpush1.msra.mxu0 0.0
    %343 = vmatprep.subr.mxu0 0.0
    %344 = vmatpush1.msra.mxu0 0.0
    %345 = vmatprep.subr.mxu0 0.0
    %346 = vmatpush1.msra.mxu0 0.0
    %347 = vmatprep.subr.mxu0 0.0
    %348 = vmatpush1.msra.mxu0 0.0
    %349 = vmatprep.subr.mxu0 0.0
    %350 = vmatpush1.msra.mxu0 0.0
    %351 = vmatprep.subr.mxu0 0.0
    %352 = vmatpush1.msra.mxu0 0.0
    %353 = vmatprep.subr.mxu0 0.0
    %354 = vmatpush1.msra.mxu0 0.0
    %355 = vmatprep.subr.mxu0 0.0
    %356 = vmatpush1.msra.mxu0 0.0
    %357 = vmatprep.subr.mxu0 0.0
    %358 = vmatpush1.msra.mxu0 0.0
    %359 = vmatprep.subr.mxu0 0.0
    %360 = vmatpush1.msra.mxu0 0.0
    %361 = vmatprep.subr.mxu0 0.0
    %362 = vmatpush1.msra.mxu0 0.0
    %363 = vmatprep.subr.mxu0 0.0
    %364 = vmatpush1.msra.mxu0 0.0
    %365 = vmatprep.subr.mxu0 0.0
    %366 = vmatpush1.msra.mxu0 0.0
    %367 = vmatprep.subr.mxu0 0.0
    %368 = vmatpush1.msra.mxu0 0.0
    %369 = vmatprep.subr.mxu0 0.0
    %370 = vmatpush1.msra.mxu0 0.0
    %371 = vmatprep.subr.mxu0 0.0
    %372 = vmatpush1.msra.mxu0 0.0
    %373 = vmatprep.subr.mxu0 0.0
    %374 = vmatpush1.msra.mxu0 0.0
    %375 = vmatprep.subr.mxu0 0.0
    %376 = vmatpush1.msra.mxu0 0.0
    %377 = vmatprep.subr.mxu0 0.0
    %378 = vmatpush1.msra.mxu0 0.0
    %379 = vmatprep.subr.mxu0 0.0
    %380 = vmatpush1.msra.mxu0 0.0
    %381 = vmatprep.subr.mxu0 0.0
    %382 = vmatpush1.msra.mxu0 0.0
    %383 = vmatprep.mubr.f32.mxu0 0.0
    %384 = vmatmul.mubr.f32.gmra.mrb[0].mxu0 %v317
    %v385 = vpop.f32.mrb[0].mxu0
    %v386 = vadd.f32 0.0, %v385
    %v387 = vpop.f32.mrb[0].mxu0
    %388 = vdwg.mxu0
    %v389 = vadd.f32 %v315, %v386
    %v390 = vtanh.pop %v389
    %v391 = vxor.u32 %v389, 2147483648
    %v392 = vmul.f32 %v391, 1.442695
    %v393 = vpow.pop %v392
    %v394 = vadd.f32 %v393, 1.0
    %v395 = vrcp.pop %v394
    %v396 = vmul.f32 1.0, %v395
    %v397 = vsel %vm310, %v390, %v396
    %v398 = vmul.f32 %v397, 0.0
    %400 = vrot.lane.b32.xlu0 %v397, 64
    %v401 = vpop.permute.xlu0 %400
    %v403 = vmul.f32 %v397, %v401
    %405 = vrot.lane.b32.xlu0 %v403, 32
    %v406 = vpop.permute.xlu0 %405
    %v408 = vadd.f32 %v398, %v406
    %v409 = vtanh.pop %v408
    %411 = vrot.lane.b32.xlu0 %v409, 64
    %v412 = vpop.permute.xlu0 %411
    %v414 = vmul.f32 %v397, %v412
    %416 = vrot.lane.b32.xlu0 %v414, 32
    %v417 = vpop.permute.xlu0 %416
    %419 = vst.msk [vmem:[#allocation4] sm:$0xff] %vm168, %v417
    %s420 = scalar_lea.vmem [#allocation2], 8
    %v421 = vld [vmem:[%s420] sm:$0xff]
    %v422 = vsel %vm168, %v417, 0
    %424 = vmatprep.subr.mxu0 0.0
    %425 = vmatpush1.msra.mxu0 %v311
    %426 = vmatprep.subr.mxu0 0.0
    %427 = vmatpush1.msra.mxu0 %v312
    %428 = vmatprep.subr.mxu0 0.0
    %429 = vmatpush1.msra.mxu0 %v313
    %430 = vmatprep.subr.mxu0 0.0
    %431 = vmatpush1.msra.mxu0 %v314
    %432 = vmatprep.subr.mxu0 0.0
    %433 = vmatpush1.msra.mxu0 0.0
    %434 = vmatprep.subr.mxu0 0.0
    %435 = vmatpush1.msra.mxu0 0.0
    %436 = vmatprep.subr.mxu0 0.0
    %437 = vmatpush1.msra.mxu0 0.0
    %438 = vmatprep.subr.mxu0 0.0
    %439 = vmatpush1.msra.mxu0 0.0
    %440 = vmatprep.subr.mxu0 0.0
    %441 = vmatpush1.msra.mxu0 0.0
    %442 = vmatprep.subr.mxu0 0.0
    %443 = vmatpush1.msra.mxu0 0.0
    %444 = vmatprep.subr.mxu0 0.0
    %445 = vmatpush1.msra.mxu0 0.0
    %446 = vmatprep.subr.mxu0 0.0
    %447 = vmatpush1.msra.mxu0 0.0
    %448 = vmatprep.subr.mxu0 0.0
    %449 = vmatpush1.msra.mxu0 0.0
    %450 = vmatprep.subr.mxu0 0.0
    %451 = vmatpush1.msra.mxu0 0.0
    %452 = vmatprep.subr.mxu0 0.0
    %453 = vmatpush1.msra.mxu0 0.0
    %454 = vmatprep.subr.mxu0 0.0
    %455 = vmatpush1.msra.mxu0 0.0
    %456 = vmatprep.subr.mxu0 0.0
    %457 = vmatpush1.msra.mxu0 0.0
    %458 = vmatprep.subr.mxu0 0.0
    %459 = vmatpush1.msra.mxu0 0.0
    %460 = vmatprep.subr.mxu0 0.0
    %461 = vmatpush1.msra.mxu0 0.0
    %462 = vmatprep.subr.mxu0 0.0
    %463 = vmatpush1.msra.mxu0 0.0
    %464 = vmatprep.subr.mxu0 0.0
    %465 = vmatpush1.msra.mxu0 0.0
    %466 = vmatprep.subr.mxu0 0.0
    %467 = vmatpush1.msra.mxu0 0.0
    %468 = vmatprep.subr.mxu0 0.0
    %469 = vmatpush1.msra.mxu0 0.0
    %470 = vmatprep.subr.mxu0 0.0
    %471 = vmatpush1.msra.mxu0 0.0
    %472 = vmatprep.subr.mxu0 0.0
    %473 = vmatpush1.msra.mxu0 0.0
    %474 = vmatprep.subr.mxu0 0.0
    %475 = vmatpush1.msra.mxu0 0.0
    %476 = vmatprep.subr.mxu0 0.0
    %477 = vmatpush1.msra.mxu0 0.0
    %478 = vmatprep.subr.mxu0 0.0
    %479 = vmatpush1.msra.mxu0 0.0
    %480 = vmatprep.subr.mxu0 0.0
    %481 = vmatpush1.msra.mxu0 0.0
    %482 = vmatprep.subr.mxu0 0.0
    %483 = vmatpush1.msra.mxu0 0.0
    %484 = vmatprep.subr.mxu0 0.0
    %485 = vmatpush1.msra.mxu0 0.0
    %486 = vmatprep.subr.mxu0 0.0
    %487 = vmatpush1.msra.mxu0 0.0
    %488 = vmatprep.mubr.f32.mxu0 0.0
    %489 = vmatmul.mubr.f32.gmra.mrb[0].mxu0 %v422
    %v490 = vpop.f32.mrb[0].mxu0
    %v491 = vadd.f32 0.0, %v490
    %v492 = vpop.f32.mrb[0].mxu0
    %493 = vdwg.mxu0
    %v494 = vadd.f32 %v421, %v491
    %v495 = vtanh.pop %v494
    %v496 = vxor.u32 %v494, 2147483648
    %v497 = vmul.f32 %v496, 1.442695
    %v498 = vpow.pop %v497
    %v499 = vadd.f32 %v498, 1.0
    %v500 = vrcp.pop %v499
    %v501 = vmul.f32 1.0, %v500
    %v502 = vsel %vm310, %v495, %v501
    %v503 = vmul.f32 %v502, %v408
    %505 = vrot.lane.b32.xlu0 %v502, 64
    %v506 = vpop.permute.xlu0 %505
    %v508 = vmul.f32 %v502, %v506
    %510 = vrot.lane.b32.xlu0 %v508, 32
    %v511 = vpop.permute.xlu0 %510
    %v513 = vadd.f32 %v503, %v511
    %v514 = vtanh.pop %v513
    %516 = vrot.lane.b32.xlu0 %v514, 64
    %v517 = vpop.permute.xlu0 %516
    %v519 = vmul.f32 %v502, %v517
    %521 = vrot.lane.b32.xlu0 %v519, 32
    %v522 = vpop.permute.xlu0 %521
    %s524 = scalar_lea.vmem [#allocation4], 8
    %525 = vst.msk [vmem:[%s524] sm:$0xff] %vm168, %v522
    %s526 = scalar_lea.vmem [#allocation2], 16
    %v527 = vld [vmem:[%s526] sm:$0xff]
    %v528 = vsel %vm168, %v522, 0
    %530 = vmatprep.subr.mxu0 0.0
    %531 = vmatpush1.msra.mxu0 %v311
    %532 = vmatprep.subr.mxu0 0.0
    %533 = vmatpush1.msra.mxu0 %v312
    %534 = vmatprep.subr.mxu0 0.0
    %535 = vmatpush1.msra.mxu0 %v313
    %536 = vmatprep.subr.mxu0 0.0
    %537 = vmatpush1.msra.mxu0 %v314
    %538 = vmatprep.subr.mxu0 0.0
    %539 = vmatpush1.msra.mxu0 0.0
    %540 = vmatprep.subr.mxu0 0.0
    %541 = vmatpush1.msra.mxu0 0.0
    %542 = vmatprep.subr.mxu0 0.0
    %543 = vmatpush1.msra.mxu0 0.0
    %544 = vmatprep.subr.mxu0 0.0
    %545 = vmatpush1.msra.mxu0 0.0
    %546 = vmatprep.subr.mxu0 0.0
    %547 = vmatpush1.msra.mxu0 0.0
    %548 = vmatprep.subr.mxu0 0.0
    %549 = vmatpush1.msra.mxu0 0.0
    %550 = vmatprep.subr.mxu0 0.0
    %551 = vmatpush1.msra.mxu0 0.0
    %552 = vmatprep.subr.mxu0 0.0
    %553 = vmatpush1.msra.mxu0 0.0
    %554 = vmatprep.subr.mxu0 0.0
    %555 = vmatpush1.msra.mxu0 0.0
    %556 = vmatprep.subr.mxu0 0.0
    %557 = vmatpush1.msra.mxu0 0.0
    %558 = vmatprep.subr.mxu0 0.0
    %559 = vmatpush1.msra.mxu0 0.0
    %560 = vmatprep.subr.mxu0 0.0
    %561 = vmatpush1.msra.mxu0 0.0
    %562 = vmatprep.subr.mxu0 0.0
    %563 = vmatpush1.msra.mxu0 0.0
    %564 = vmatprep.subr.mxu0 0.0
    %565 = vmatpush1.msra.mxu0 0.0
    %566 = vmatprep.subr.mxu0 0.0
    %567 = vmatpush1.msra.mxu0 0.0
    %568 = vmatprep.subr.mxu0 0.0
    %569 = vmatpush1.msra.mxu0 0.0
    %570 = vmatprep.subr.mxu0 0.0
    %571 = vmatpush1.msra.mxu0 0.0
    %572 = vmatprep.subr.mxu0 0.0
    %573 = vmatpush1.msra.mxu0 0.0
    %574 = vmatprep.subr.mxu0 0.0
    %575 = vmatpush1.msra.mxu0 0.0
    %576 = vmatprep.subr.mxu0 0.0
    %577 = vmatpush1.msra.mxu0 0.0
    %578 = vmatprep.subr.mxu0 0.0
    %579 = vmatpush1.msra.mxu0 0.0
    %580 = vmatprep.subr.mxu0 0.0
    %581 = vmatpush1.msra.mxu0 0.0
    %582 = vmatprep.subr.mxu0 0.0
    %583 = vmatpush1.msra.mxu0 0.0
    %584 = vmatprep.subr.mxu0 0.0
    %585 = vmatpush1.msra.mxu0 0.0
    %586 = vmatprep.subr.mxu0 0.0
    %587 = vmatpush1.msra.mxu0 0.0
    %588 = vmatprep.subr.mxu0 0.0
    %589 = vmatpush1.msra.mxu0 0.0
    %590 = vmatprep.subr.mxu0 0.0
    %591 = vmatpush1.msra.mxu0 0.0
    %592 = vmatprep.subr.mxu0 0.0
    %593 = vmatpush1.msra.mxu0 0.0
    %594 = vmatprep.mubr.f32.mxu0 0.0
    %595 = vmatmul.mubr.f32.gmra.mrb[0].mxu0 %v528
    %v596 = vpop.f32.mrb[0].mxu0
    %v597 = vadd.f32 0.0, %v596
    %v598 = vpop.f32.mrb[0].mxu0
    %599 = vdwg.mxu0
    %v600 = vadd.f32 %v527, %v597
    %v601 = vtanh.pop %v600
    %v602 = vxor.u32 %v600, 2147483648
    %v603 = vmul.f32 %v602, 1.442695
    %v604 = vpow.pop %v603
    %v605 = vadd.f32 %v604, 1.0
    %v606 = vrcp.pop %v605
    %v607 = vmul.f32 1.0, %v606
    %v608 = vsel %vm310, %v601, %v607
    %v609 = vmul.f32 %v608, %v513
    %611 = vrot.lane.b32.xlu0 %v608, 64
    %v612 = vpop.permute.xlu0 %611
    %v614 = vmul.f32 %v608, %v612
    %616 = vrot.lane.b32.xlu0 %v614, 32
    %v617 = vpop.permute.xlu0 %616
    %v619 = vadd.f32 %v609, %v617
    %v620 = vtanh.pop %v619
    %622 = vrot.lane.b32.xlu0 %v620, 64
    %v623 = vpop.permute.xlu0 %622
    %v625 = vmul.f32 %v608, %v623
    %627 = vrot.lane.b32.xlu0 %v625, 32
    %v628 = vpop.permute.xlu0 %627
    %s630 = scalar_lea.vmem [#allocation4], 16
    %631 = vst.msk [vmem:[%s630] sm:$0xff] %vm168, %v628
    %s632 = scalar_lea.vmem [#allocation2], 24
    %v633 = vld [vmem:[%s632] sm:$0xff]
    %v634 = vsel %vm168, %v628, 0
    %636 = vmatprep.subr.mxu0 0.0
    %637 = vmatpush1.msra.mxu0 %v311
    %638 = vmatprep.subr.mxu0 0.0
    %639 = vmatpush1.msra.mxu0 %v312
    %640 = vmatprep.subr.mxu0 0.0
    %641 = vmatpush1.msra.mxu0 %v313
    %642 = vmatprep.subr.mxu0 0.0
    %643 = vmatpush1.msra.mxu0 %v314
    %644 = vmatprep.subr.mxu0 0.0
    %645 = vmatpush1.msra.mxu0 0.0
    %646 = vmatprep.subr.mxu0 0.0
    %647 = vmatpush1.msra.mxu0 0.0
    %648 = vmatprep.subr.mxu0 0.0
    %649 = vmatpush1.msra.mxu0 0.0
    %650 = vmatprep.subr.mxu0 0.0
    %651 = vmatpush1.msra.mxu0 0.0
    %652 = vmatprep.subr.mxu0 0.0
    %653 = vmatpush1.msra.mxu0 0.0
    %654 = vmatprep.subr.mxu0 0.0
    %655 = vmatpush1.msra.mxu0 0.0
    %656 = vmatprep.subr.mxu0 0.0
    %657 = vmatpush1.msra.mxu0 0.0
    %658 = vmatprep.subr.mxu0 0.0
    %659 = vmatpush1.msra.mxu0 0.0
    %660 = vmatprep.subr.mxu0 0.0
    %661 = vmatpush1.msra.mxu0 0.0
    %662 = vmatprep.subr.mxu0 0.0
    %663 = vmatpush1.msra.mxu0 0.0
    %664 = vmatprep.subr.mxu0 0.0
    %665 = vmatpush1.msra.mxu0 0.0
    %666 = vmatprep.subr.mxu0 0.0
    %667 = vmatpush1.msra.mxu0 0.0
    %668 = vmatprep.subr.mxu0 0.0
    %669 = vmatpush1.msra.mxu0 0.0
    %670 = vmatprep.subr.mxu0 0.0
    %671 = vmatpush1.msra.mxu0 0.0
    %672 = vmatprep.subr.mxu0 0.0
    %673 = vmatpush1.msra.mxu0 0.0
    %674 = vmatprep.subr.mxu0 0.0
    %675 = vmatpush1.msra.mxu0 0.0
    %676 = vmatprep.subr.mxu0 0.0
    %677 = vmatpush1.msra.mxu0 0.0
    %678 = vmatprep.subr.mxu0 0.0
    %679 = vmatpush1.msra.mxu0 0.0
    %680 = vmatprep.subr.mxu0 0.0
    %681 = vmatpush1.msra.mxu0 0.0
    %682 = vmatprep.subr.mxu0 0.0
    %683 = vmatpush1.msra.mxu0 0.0
    %684 = vmatprep.subr.mxu0 0.0
    %685 = vmatpush1.msra.mxu0 0.0
    %686 = vmatprep.subr.mxu0 0.0
    %687 = vmatpush1.msra.mxu0 0.0
    %688 = vmatprep.subr.mxu0 0.0
    %689 = vmatpush1.msra.mxu0 0.0
    %690 = vmatprep.subr.mxu0 0.0
    %691 = vmatpush1.msra.mxu0 0.0
    %692 = vmatprep.subr.mxu0 0.0
    %693 = vmatpush1.msra.mxu0 0.0
    %694 = vmatprep.subr.mxu0 0.0
    %695 = vmatpush1.msra.mxu0 0.0
    %696 = vmatprep.subr.mxu0 0.0
    %697 = vmatpush1.msra.mxu0 0.0
    %698 = vmatprep.subr.mxu0 0.0
    %699 = vmatpush1.msra.mxu0 0.0
    %700 = vmatprep.mubr.f32.mxu0 0.0
    %701 = vmatmul.mubr.f32.gmra.mrb[0].mxu0 %v634
    %v702 = vpop.f32.mrb[0].mxu0
    %v703 = vadd.f32 0.0, %v702
    %v704 = vpop.f32.mrb[0].mxu0
    %705 = vdwg.mxu0
    %v706 = vadd.f32 %v633, %v703
    %v707 = vtanh.pop %v706
    %v708 = vxor.u32 %v706, 2147483648
    %v709 = vmul.f32 %v708, 1.442695
    %v710 = vpow.pop %v709
    %v711 = vadd.f32 %v710, 1.0
    %v712 = vrcp.pop %v711
    %v713 = vmul.f32 1.0, %v712
    %v714 = vsel %vm310, %v707, %v713
    %v715 = vmul.f32 %v714, %v619
    %717 = vrot.lane.b32.xlu0 %v714, 64
    %v718 = vpop.permute.xlu0 %717
    %v720 = vmul.f32 %v714, %v718
    %722 = vrot.lane.b32.xlu0 %v720, 32
    %v723 = vpop.permute.xlu0 %722
    %v725 = vadd.f32 %v715, %v723
    %v726 = vtanh.pop %v725
    %728 = vrot.lane.b32.xlu0 %v726, 64
    %v729 = vpop.permute.xlu0 %728
    %v731 = vmul.f32 %v714, %v729
    %733 = vrot.lane.b32.xlu0 %v731, 32
    %v734 = vpop.permute.xlu0 %733
    %s736 = scalar_lea.vmem [#allocation4], 24
    %737 = vst.msk [vmem:[%s736] sm:$0xff] %vm168, %v734
    %s738 = scalar_lea.vmem [#allocation2], 32
    %v739 = vld [vmem:[%s738] sm:$0xff]
    %v740 = vsel %vm168, %v734, 0
    %742 = vmatprep.subr.mxu0 0.0
    %743 = vmatpush1.msra.mxu0 %v311
    %744 = vmatprep.subr.mxu0 0.0
    %745 = vmatpush1.msra.mxu0 %v312
    %746 = vmatprep.subr.mxu0 0.0
    %747 = vmatpush1.msra.mxu0 %v313
    %748 = vmatprep.subr.mxu0 0.0
    %749 = vmatpush1.msra.mxu0 %v314
    %750 = vmatprep.subr.mxu0 0.0
    %751 = vmatpush1.msra.mxu0 0.0
    %752 = vmatprep.subr.mxu0 0.0
    %753 = vmatpush1.msra.mxu0 0.0
    %754 = vmatprep.subr.mxu0 0.0
    %755 = vmatpush1.msra.mxu0 0.0
    %756 = vmatprep.subr.mxu0 0.0
    %757 = vmatpush1.msra.mxu0 0.0
    %758 = vmatprep.subr.mxu0 0.0
    %759 = vmatpush1.msra.mxu0 0.0
    %760 = vmatprep.subr.mxu0 0.0
    %761 = vmatpush1.msra.mxu0 0.0
    %762 = vmatprep.subr.mxu0 0.0
    %763 = vmatpush1.msra.mxu0 0.0
    %764 = vmatprep.subr.mxu0 0.0
    %765 = vmatpush1.msra.mxu0 0.0
    %766 = vmatprep.subr.mxu0 0.0
    %767 = vmatpush1.msra.mxu0 0.0
    %768 = vmatprep.subr.mxu0 0.0
    %769 = vmatpush1.msra.mxu0 0.0
    %770 = vmatprep.subr.mxu0 0.0
    %771 = vmatpush1.msra.mxu0 0.0
    %772 = vmatprep.subr.mxu0 0.0
    %773 = vmatpush1.msra.mxu0 0.0
    %774 = vmatprep.subr.mxu0 0.0
    %775 = vmatpush1.msra.mxu0 0.0
    %776 = vmatprep.subr.mxu0 0.0
    %777 = vmatpush1.msra.mxu0 0.0
    %778 = vmatprep.subr.mxu0 0.0
    %779 = vmatpush1.msra.mxu0 0.0
    %780 = vmatprep.subr.mxu0 0.0
    %781 = vmatpush1.msra.mxu0 0.0
    %782 = vmatprep.subr.mxu0 0.0
    %783 = vmatpush1.msra.mxu0 0.0
    %784 = vmatprep.subr.mxu0 0.0
    %785 = vmatpush1.msra.mxu0 0.0
    %786 = vmatprep.subr.mxu0 0.0
    %787 = vmatpush1.msra.mxu0 0.0
    %788 = vmatprep.subr.mxu0 0.0
    %789 = vmatpush1.msra.mxu0 0.0
    %790 = vmatprep.subr.mxu0 0.0
    %791 = vmatpush1.msra.mxu0 0.0
    %792 = vmatprep.subr.mxu0 0.0
    %793 = vmatpush1.msra.mxu0 0.0
    %794 = vmatprep.subr.mxu0 0.0
    %795 = vmatpush1.msra.mxu0 0.0
    %796 = vmatprep.subr.mxu0 0.0
    %797 = vmatpush1.msra.mxu0 0.0
    %798 = vmatprep.subr.mxu0 0.0
    %799 = vmatpush1.msra.mxu0 0.0
    %800 = vmatprep.subr.mxu0 0.0
    %801 = vmatpush1.msra.mxu0 0.0
    %802 = vmatprep.subr.mxu0 0.0
    %803 = vmatpush1.msra.mxu0 0.0
    %804 = vmatprep.subr.mxu0 0.0
    %805 = vmatpush1.msra.mxu0 0.0
    %806 = vmatprep.mubr.f32.mxu0 0.0
    %807 = vmatmul.mubr.f32.gmra.mrb[0].mxu0 %v740
    %v808 = vpop.f32.mrb[0].mxu0
    %v809 = vadd.f32 0.0, %v808
    %v810 = vpop.f32.mrb[0].mxu0
    %811 = vdwg.mxu0
    %v812 = vadd.f32 %v739, %v809
    %v813 = vtanh.pop %v812
    %v814 = vxor.u32 %v812, 2147483648
    %v815 = vmul.f32 %v814, 1.442695
    %v816 = vpow.pop %v815
    %v817 = vadd.f32 %v816, 1.0
    %v818 = vrcp.pop %v817
    %v819 = vmul.f32 1.0, %v818
    %v820 = vsel %vm310, %v813, %v819
    %v821 = vmul.f32 %v820, %v725
    %823 = vrot.lane.b32.xlu0 %v820, 64
    %v824 = vpop.permute.xlu0 %823
    %v826 = vmul.f32 %v820, %v824
    %828 = vrot.lane.b32.xlu0 %v826, 32
    %v829 = vpop.permute.xlu0 %828
    %v831 = vadd.f32 %v821, %v829
    %v832 = vtanh.pop %v831
    %834 = vrot.lane.b32.xlu0 %v832, 64
    %v835 = vpop.permute.xlu0 %834
    %v837 = vmul.f32 %v820, %v835
    %839 = vrot.lane.b32.xlu0 %v837, 32
    %v840 = vpop.permute.xlu0 %839
    %s842 = scalar_lea.vmem [#allocation4], 32
    %843 = vst.msk [vmem:[%s842] sm:$0xff] %vm168, %v840
    %s844 = scalar_lea.vmem [#allocation2], 40
    %v845 = vld [vmem:[%s844] sm:$0xff]
    %v846 = vsel %vm168, %v840, 0
    %848 = vmatprep.subr.mxu0 0.0
    %849 = vmatpush1.msra.mxu0 %v311
    %850 = vmatprep.subr.mxu0 0.0
    %851 = vmatpush1.msra.mxu0 %v312
    %852 = vmatprep.subr.mxu0 0.0
    %853 = vmatpush1.msra.mxu0 %v313
    %854 = vmatprep.subr.mxu0 0.0
    %855 = vmatpush1.msra.mxu0 %v314
    %856 = vmatprep.subr.mxu0 0.0
    %857 = vmatpush1.msra.mxu0 0.0
    %858 = vmatprep.subr.mxu0 0.0
    %859 = vmatpush1.msra.mxu0 0.0
    %860 = vmatprep.subr.mxu0 0.0
    %861 = vmatpush1.msra.mxu0 0.0
    %862 = vmatprep.subr.mxu0 0.0
    %863 = vmatpush1.msra.mxu0 0.0
    %864 = vmatprep.subr.mxu0 0.0
    %865 = vmatpush1.msra.mxu0 0.0
    %866 = vmatprep.subr.mxu0 0.0
    %867 = vmatpush1.msra.mxu0 0.0
    %868 = vmatprep.subr.mxu0 0.0
    %869 = vmatpush1.msra.mxu0 0.0
    %870 = vmatprep.subr.mxu0 0.0
    %871 = vmatpush1.msra.mxu0 0.0
    %872 = vmatprep.subr.mxu0 0.0
    %873 = vmatpush1.msra.mxu0 0.0
    %874 = vmatprep.subr.mxu0 0.0
    %875 = vmatpush1.msra.mxu0 0.0
    %876 = vmatprep.subr.mxu0 0.0
    %877 = vmatpush1.msra.mxu0 0.0
    %878 = vmatprep.subr.mxu0 0.0
    %879 = vmatpush1.msra.mxu0 0.0
    %880 = vmatprep.subr.mxu0 0.0
    %881 = vmatpush1.msra.mxu0 0.0
    %882 = vmatprep.subr.mxu0 0.0
    %883 = vmatpush1.msra.mxu0 0.0
    %884 = vmatprep.subr.mxu0 0.0
    %885 = vmatpush1.msra.mxu0 0.0
    %886 = vmatprep.subr.mxu0 0.0
    %887 = vmatpush1.msra.mxu0 0.0
    %888 = vmatprep.subr.mxu0 0.0
    %889 = vmatpush1.msra.mxu0 0.0
    %890 = vmatprep.subr.mxu0 0.0
    %891 = vmatpush1.msra.mxu0 0.0
    %892 = vmatprep.subr.mxu0 0.0
    %893 = vmatpush1.msra.mxu0 0.0
    %894 = vmatprep.subr.mxu0 0.0
    %895 = vmatpush1.msra.mxu0 0.0
    %896 = vmatprep.subr.mxu0 0.0
    %897 = vmatpush1.msra.mxu0 0.0
    %898 = vmatprep.subr.mxu0 0.0
    %899 = vmatpush1.msra.mxu0 0.0
    %900 = vmatprep.subr.mxu0 0.0
    %901 = vmatpush1.msra.mxu0 0.0
    %902 = vmatprep.subr.mxu0 0.0
    %903 = vmatpush1.msra.mxu0 0.0
    %904 = vmatprep.subr.mxu0 0.0
    %905 = vmatpush1.msra.mxu0 0.0
    %906 = vmatprep.subr.mxu0 0.0
    %907 = vmatpush1.msra.mxu0 0.0
    %908 = vmatprep.subr.mxu0 0.0
    %909 = vmatpush1.msra.mxu0 0.0
    %910 = vmatprep.subr.mxu0 0.0
    %911 = vmatpush1.msra.mxu0 0.0
    %912 = vmatprep.mubr.f32.mxu0 0.0
    %913 = vmatmul.mubr.f32.gmra.mrb[0].mxu0 %v846
    %v914 = vpop.f32.mrb[0].mxu0
    %v915 = vadd.f32 0.0, %v914
    %v916 = vpop.f32.mrb[0].mxu0
    %917 = vdwg.mxu0
    %v918 = vadd.f32 %v845, %v915
    %v919 = vtanh.pop %v918
    %v920 = vxor.u32 %v918, 2147483648
    %v921 = vmul.f32 %v920, 1.442695
    %v922 = vpow.pop %v921
    %v923 = vadd.f32 %v922, 1.0
    %v924 = vrcp.pop %v923
    %v925 = vmul.f32 1.0, %v924
    %v926 = vsel %vm310, %v919, %v925
    %v927 = vmul.f32 %v926, %v831
    %929 = vrot.lane.b32.xlu0 %v926, 64
    %v930 = vpop.permute.xlu0 %929
    %v932 = vmul.f32 %v926, %v930
    %934 = vrot.lane.b32.xlu0 %v932, 32
    %v935 = vpop.permute.xlu0 %934
    %v937 = vadd.f32 %v927, %v935
    %v938 = vtanh.pop %v937
    %940 = vrot.lane.b32.xlu0 %v938, 64
    %v941 = vpop.permute.xlu0 %940
    %v943 = vmul.f32 %v926, %v941
    %945 = vrot.lane.b32.xlu0 %v943, 32
    %v946 = vpop.permute.xlu0 %945
    %s948 = scalar_lea.vmem [#allocation4], 40
    %949 = vst.msk [vmem:[%s948] sm:$0xff] %vm168, %v946
    %s950 = scalar_lea.vmem [#allocation2], 48
    %v951 = vld [vmem:[%s950] sm:$0xff]
    %v952 = vsel %vm168, %v946, 0
    %954 = vmatprep.subr.mxu0 0.0
    %955 = vmatpush1.msra.mxu0 %v311
    %956 = vmatprep.subr.mxu0 0.0
    %957 = vmatpush1.msra.mxu0 %v312
    %958 = vmatprep.subr.mxu0 0.0
    %959 = vmatpush1.msra.mxu0 %v313
    %960 = vmatprep.subr.mxu0 0.0
    %961 = vmatpush1.msra.mxu0 %v314
    %962 = vmatprep.subr.mxu0 0.0
    %963 = vmatpush1.msra.mxu0 0.0
    %964 = vmatprep.subr.mxu0 0.0
    %965 = vmatpush1.msra.mxu0 0.0
    %966 = vmatprep.subr.mxu0 0.0
    %967 = vmatpush1.msra.mxu0 0.0
    %968 = vmatprep.subr.mxu0 0.0
    %969 = vmatpush1.msra.mxu0 0.0
    %970 = vmatprep.subr.mxu0 0.0
    %971 = vmatpush1.msra.mxu0 0.0
    %972 = vmatprep.subr.mxu0 0.0
    %973 = vmatpush1.msra.mxu0 0.0
    %974 = vmatprep.subr.mxu0 0.0
    %975 = vmatpush1.msra.mxu0 0.0
    %976 = vmatprep.subr.mxu0 0.0
    %977 = vmatpush1.msra.mxu0 0.0
    %978 = vmatprep.subr.mxu0 0.0
    %979 = vmatpush1.msra.mxu0 0.0
    %980 = vmatprep.subr.mxu0 0.0
    %981 = vmatpush1.msra.mxu0 0.0
    %982 = vmatprep.subr.mxu0 0.0
    %983 = vmatpush1.msra.mxu0 0.0
    %984 = vmatprep.subr.mxu0 0.0
    %985 = vmatpush1.msra.mxu0 0.0
    %986 = vmatprep.subr.mxu0 0.0
    %987 = vmatpush1.msra.mxu0 0.0
    %988 = vmatprep.subr.mxu0 0.0
    %989 = vmatpush1.msra.mxu0 0.0
    %990 = vmatprep.subr.mxu0 0.0
    %991 = vmatpush1.msra.mxu0 0.0
    %992 = vmatprep.subr.mxu0 0.0
    %993 = vmatpush1.msra.mxu0 0.0
    %994 = vmatprep.subr.mxu0 0.0
    %995 = vmatpush1.msra.mxu0 0.0
    %996 = vmatprep.subr.mxu0 0.0
    %997 = vmatpush1.msra.mxu0 0.0
    %998 = vmatprep.subr.mxu0 0.0
    %999 = vmatpush1.msra.mxu0 0.0
    %1000 = vmatprep.subr.mxu0 0.0
    %1001 = vmatpush1.msra.mxu0 0.0
    %1002 = vmatprep.subr.mxu0 0.0
    %1003 = vmatpush1.msra.mxu0 0.0
    %1004 = vmatprep.subr.mxu0 0.0
    %1005 = vmatpush1.msra.mxu0 0.0
    %1006 = vmatprep.subr.mxu0 0.0
    %1007 = vmatpush1.msra.mxu0 0.0
    %1008 = vmatprep.subr.mxu0 0.0
    %1009 = vmatpush1.msra.mxu0 0.0
    %1010 = vmatprep.subr.mxu0 0.0
    %1011 = vmatpush1.msra.mxu0 0.0
    %1012 = vmatprep.subr.mxu0 0.0
    %1013 = vmatpush1.msra.mxu0 0.0
    %1014 = vmatprep.subr.mxu0 0.0
    %1015 = vmatpush1.msra.mxu0 0.0
    %1016 = vmatprep.subr.mxu0 0.0
    %1017 = vmatpush1.msra.mxu0 0.0
    %1018 = vmatprep.mubr.f32.mxu0 0.0
    %1019 = vmatmul.mubr.f32.gmra.mrb[0].mxu0 %v952
    %v1020 = vpop.f32.mrb[0].mxu0
    %v1021 = vadd.f32 0.0, %v1020
    %v1022 = vpop.f32.mrb[0].mxu0
    %1023 = vdwg.mxu0
    %v1024 = vadd.f32 %v951, %v1021
    %v1025 = vtanh.pop %v1024
    %v1026 = vxor.u32 %v1024, 2147483648
    %v1027 = vmul.f32 %v1026, 1.442695
    %v1028 = vpow.pop %v1027
    %v1029 = vadd.f32 %v1028, 1.0
    %v1030 = vrcp.pop %v1029
    %v1031 = vmul.f32 1.0, %v1030
    %v1032 = vsel %vm310, %v1025, %v1031
    %v1033 = vmul.f32 %v1032, %v937
    %1035 = vrot.lane.b32.xlu0 %v1032, 64
    %v1036 = vpop.permute.xlu0 %1035
    %v1038 = vmul.f32 %v1032, %v1036
    %1040 = vrot.lane.b32.xlu0 %v1038, 32
    %v1041 = vpop.permute.xlu0 %1040
    %v1043 = vadd.f32 %v1033, %v1041
    %v1044 = vtanh.pop %v1043
    %1046 = vrot.lane.b32.xlu0 %v1044, 64
    %v1047 = vpop.permute.xlu0 %1046
    %v1049 = vmul.f32 %v1032, %v1047
    %1051 = vrot.lane.b32.xlu0 %v1049, 32
    %v1052 = vpop.permute.xlu0 %1051
    %s1054 = scalar_lea.vmem [#allocation4], 48
    %1055 = vst.msk [vmem:[%s1054] sm:$0xff] %vm168, %v1052
    %s1056 = scalar_lea.vmem [#allocation2], 56
    %v1057 = vld [vmem:[%s1056] sm:$0xff]
    %v1058 = vsel %vm168, %v1052, 0
    %1060 = vmatprep.subr.mxu0 0.0
    %1061 = vmatpush1.msra.mxu0 %v311
    %1062 = vmatprep.subr.mxu0 0.0
    %1063 = vmatpush1.msra.mxu0 %v312
    %1064 = vmatprep.subr.mxu0 0.0
    %1065 = vmatpush1.msra.mxu0 %v313
    %1066 = vmatprep.subr.mxu0 0.0
    %1067 = vmatpush1.msra.mxu0 %v314
    %1068 = vmatprep.subr.mxu0 0.0
    %1069 = vmatpush1.msra.mxu0 0.0
    %1070 = vmatprep.subr.mxu0 0.0
    %1071 = vmatpush1.msra.mxu0 0.0
    %1072 = vmatprep.subr.mxu0 0.0
    %1073 = vmatpush1.msra.mxu0 0.0
    %1074 = vmatprep.subr.mxu0 0.0
    %1075 = vmatpush1.msra.mxu0 0.0
    %1076 = vmatprep.subr.mxu0 0.0
    %1077 = vmatpush1.msra.mxu0 0.0
    %1078 = vmatprep.subr.mxu0 0.0
    %1079 = vmatpush1.msra.mxu0 0.0
    %1080 = vmatprep.subr.mxu0 0.0
    %1081 = vmatpush1.msra.mxu0 0.0
    %1082 = vmatprep.subr.mxu0 0.0
    %1083 = vmatpush1.msra.mxu0 0.0
    %1084 = vmatprep.subr.mxu0 0.0
    %1085 = vmatpush1.msra.mxu0 0.0
    %1086 = vmatprep.subr.mxu0 0.0
    %1087 = vmatpush1.msra.mxu0 0.0
    %1088 = vmatprep.subr.mxu0 0.0
    %1089 = vmatpush1.msra.mxu0 0.0
    %1090 = vmatprep.subr.mxu0 0.0
    %1091 = vmatpush1.msra.mxu0 0.0
    %1092 = vmatprep.subr.mxu0 0.0
    %1093 = vmatpush1.msra.mxu0 0.0
    %1094 = vmatprep.subr.mxu0 0.0
    %1095 = vmatpush1.msra.mxu0 0.0
    %1096 = vmatprep.subr.mxu0 0.0
    %1097 = vmatpush1.msra.mxu0 0.0
    %1098 = vmatprep.subr.mxu0 0.0
    %1099 = vmatpush1.msra.mxu0 0.0
    %1100 = vmatprep.subr.mxu0 0.0
    %1101 = vmatpush1.msra.mxu0 0.0
    %1102 = vmatprep.subr.mxu0 0.0
    %1103 = vmatpush1.msra.mxu0 0.0
    %1104 = vmatprep.subr.mxu0 0.0
    %1105 = vmatpush1.msra.mxu0 0.0
    %1106 = vmatprep.subr.mxu0 0.0
    %1107 = vmatpush1.msra.mxu0 0.0
    %1108 = vmatprep.subr.mxu0 0.0
    %1109 = vmatpush1.msra.mxu0 0.0
    %1110 = vmatprep.subr.mxu0 0.0
    %1111 = vmatpush1.msra.mxu0 0.0
    %1112 = vmatprep.subr.mxu0 0.0
    %1113 = vmatpush1.msra.mxu0 0.0
    %1114 = vmatprep.subr.mxu0 0.0
    %1115 = vmatpush1.msra.mxu0 0.0
    %1116 = vmatprep.subr.mxu0 0.0
    %1117 = vmatpush1.msra.mxu0 0.0
    %1118 = vmatprep.subr.mxu0 0.0
    %1119 = vmatpush1.msra.mxu0 0.0
    %1120 = vmatprep.subr.mxu0 0.0
    %1121 = vmatpush1.msra.mxu0 0.0
    %1122 = vmatprep.subr.mxu0 0.0
    %1123 = vmatpush1.msra.mxu0 0.0
    %1124 = vmatprep.mubr.f32.mxu0 0.0
    %1125 = vmatmul.mubr.f32.gmra.mrb[0].mxu0 %v1058
    %v1126 = vpop.f32.mrb[0].mxu0
    %v1127 = vadd.f32 0.0, %v1126
    %v1128 = vpop.f32.mrb[0].mxu0
    %1129 = vdwg.mxu0
    %v1130 = vadd.f32 %v1057, %v1127
    %v1131 = vtanh.pop %v1130
    %v1132 = vxor.u32 %v1130, 2147483648
    %v1133 = vmul.f32 %v1132, 1.442695
    %v1134 = vpow.pop %v1133
    %v1135 = vadd.f32 %v1134, 1.0
    %v1136 = vrcp.pop %v1135
    %v1137 = vmul.f32 1.0, %v1136
    %v1138 = vsel %vm310, %v1131, %v1137
    %v1139 = vmul.f32 %v1138, %v1043
    %1141 = vrot.lane.b32.xlu0 %v1138, 64
    %v1142 = vpop.permute.xlu0 %1141
    %v1144 = vmul.f32 %v1138, %v1142
    %1146 = vrot.lane.b32.xlu0 %v1144, 32
    %v1147 = vpop.permute.xlu0 %1146
    %v1149 = vadd.f32 %v1139, %v1147
    %v1150 = vtanh.pop %v1149
    %1152 = vrot.lane.b32.xlu0 %v1150, 64
    %v1153 = vpop.permute.xlu0 %1152
    %v1155 = vmul.f32 %v1138, %v1153
    %1157 = vrot.lane.b32.xlu0 %v1155, 32
    %v1158 = vpop.permute.xlu0 %1157
    %s1160 = scalar_lea.vmem [#allocation4], 56
    %1161 = vst.msk [vmem:[%s1160] sm:$0xff] %vm168, %v1158
    %v1162 = vld [vmem:[#allocation4] sm:$0xff]
    %v1163 = vld [vmem:[#allocation4 + $0x8] sm:$0xff]
    %v1164 = vld [vmem:[#allocation4 + $0x10] sm:$0xff]
    %v1165 = vld [vmem:[#allocation4 + $0x18] sm:$0xff]
    %v1166 = vld [vmem:[#allocation4 + $0x20] sm:$0xff]
    %v1167 = vld [vmem:[#allocation4 + $0x28] sm:$0xff]
    %v1168 = vld [vmem:[#allocation4 + $0x30] sm:$0xff]
    %v1169 = vld [vmem:[#allocation4 + $0x38] sm:$0xff]
    %v1170 = vld [vmem:[#allocation14] sm:$0xff]
    %v1171 = vld [vmem:[#allocation14 + $0x8] sm:$0xff]
    %v1172 = vld [vmem:[#allocation14 + $0x10] sm:$0xff]
    %v1173 = vld [vmem:[#allocation14 + $0x18] sm:$0xff]
    %v1174 = vld [vmem:[#allocation17] sm:$0x1]
    %v1176 = vlaneseq
    %v1177 = vshrl.u32 %v1176, 7
    %v1178 = vsub.s32 0, %v1177
    %v1179 = vrot.slane %v1174, %v1178
    %v1182 = vsel %vm168, %v1162, 0
    %v1185 = vsel %vm168, %v1163, 0
    %v1188 = vsel %vm168, %v1164, 0
    %v1191 = vsel %vm168, %v1165, 0
    %v1194 = vsel %vm168, %v1166, 0
    %v1197 = vsel %vm168, %v1167, 0
    %v1200 = vsel %vm168, %v1168, 0
    %v1203 = vsel %vm168, %v1169, 0
    %1205 = vmatprep.subr.mxu0 0.0
    %1206 = vmatpush1.msra.mxu0 %v1170
    %1207 = vmatprep.subr.mxu0 0.0
    %1208 = vmatpush1.msra.mxu0 %v1171
    %1209 = vmatprep.subr.mxu0 0.0
    %1210 = vmatpush1.msra.mxu0 %v1172
    %1211 = vmatprep.subr.mxu0 0.0
    %1212 = vmatpush1.msra.mxu0 %v1173
    %1213 = vmatprep.subr.mxu0 0.0
    %1214 = vmatpush1.msra.mxu0 0.0
    %1215 = vmatprep.subr.mxu0 0.0
    %1216 = vmatpush1.msra.mxu0 0.0
    %1217 = vmatprep.subr.mxu0 0.0
    %1218 = vmatpush1.msra.mxu0 0.0
    %1219 = vmatprep.subr.mxu0 0.0
    %1220 = vmatpush1.msra.mxu0 0.0
    %1221 = vmatprep.subr.mxu0 0.0
    %1222 = vmatpush1.msra.mxu0 0.0
    %1223 = vmatprep.subr.mxu0 0.0
    %1224 = vmatpush1.msra.mxu0 0.0
    %1225 = vmatprep.subr.mxu0 0.0
    %1226 = vmatpush1.msra.mxu0 0.0
    %1227 = vmatprep.subr.mxu0 0.0
    %1228 = vmatpush1.msra.mxu0 0.0
    %1229 = vmatprep.subr.mxu0 0.0
    %1230 = vmatpush1.msra.mxu0 0.0
    %1231 = vmatprep.subr.mxu0 0.0
    %1232 = vmatpush1.msra.mxu0 0.0
    %1233 = vmatprep.subr.mxu0 0.0
    %1234 = vmatpush1.msra.mxu0 0.0
    %1235 = vmatprep.subr.mxu0 0.0
    %1236 = vmatpush1.msra.mxu0 0.0
    %1237 = vmatprep.subr.mxu0 0.0
    %1238 = vmatpush1.msra.mxu0 0.0
    %1239 = vmatprep.subr.mxu0 0.0
    %1240 = vmatpush1.msra.mxu0 0.0
    %1241 = vmatprep.subr.mxu0 0.0
    %1242 = vmatpush1.msra.mxu0 0.0
    %1243 = vmatprep.subr.mxu0 0.0
    %1244 = vmatpush1.msra.mxu0 0.0
    %1245 = vmatprep.subr.mxu0 0.0
    %1246 = vmatpush1.msra.mxu0 0.0
    %1247 = vmatprep.subr.mxu0 0.0
    %1248 = vmatpush1.msra.mxu0 0.0
    %1249 = vmatprep.subr.mxu0 0.0
    %1250 = vmatpush1.msra.mxu0 0.0
    %1251 = vmatprep.subr.mxu0 0.0
    %1252 = vmatpush1.msra.mxu0 0.0
    %1253 = vmatprep.subr.mxu0 0.0
    %1254 = vmatpush1.msra.mxu0 0.0
    %1255 = vmatprep.subr.mxu0 0.0
    %1256 = vmatpush1.msra.mxu0 0.0
    %1257 = vmatprep.subr.mxu0 0.0
    %1258 = vmatpush1.msra.mxu0 0.0
    %1259 = vmatprep.subr.mxu0 0.0
    %1260 = vmatpush1.msra.mxu0 0.0
    %1261 = vmatprep.subr.mxu0 0.0
    %1262 = vmatpush1.msra.mxu0 0.0
    %1263 = vmatprep.subr.mxu0 0.0
    %1264 = vmatpush1.msra.mxu0 0.0
    %1265 = vmatprep.subr.mxu0 0.0
    %1266 = vmatpush1.msra.mxu0 0.0
    %1267 = vmatprep.subr.mxu0 0.0
    %1268 = vmatpush1.msra.mxu0 0.0
    %1269 = vmatprep.mubr.f32.mxu0 0.0
    %1270 = vmatmul.mubr.f32.gmra.mrb[0].mxu0 %v1182
    %v1271 = vpop.f32.mrb[0].mxu0
    %v1272 = vadd.f32 %v1179, %v1271
    %v1273 = vpop.f32.mrb[0].mxu0
    %1274 = vmatprep.mubr.f32.mxu0 0.0
    %1275 = vmatmul.mubr.f32.gmra.mrb[0].mxu0 %v1185
    %v1276 = vpop.f32.mrb[0].mxu0
    %v1277 = vadd.f32 %v1179, %v1276
    %v1278 = vpop.f32.mrb[0].mxu0
    %1279 = vmatprep.mubr.f32.mxu0 0.0
    %1280 = vmatmul.mubr.f32.gmra.mrb[0].mxu0 %v1188
    %v1281 = vpop.f32.mrb[0].mxu0
    %v1282 = vadd.f32 %v1179, %v1281
    %v1283 = vpop.f32.mrb[0].mxu0
    %1284 = vmatprep.mubr.f32.mxu0 0.0
    %1285 = vmatmul.mubr.f32.gmra.mrb[0].mxu0 %v1191
    %v1286 = vpop.f32.mrb[0].mxu0
    %v1287 = vadd.f32 %v1179, %v1286
    %v1288 = vpop.f32.mrb[0].mxu0
    %1289 = vmatprep.mubr.f32.mxu0 0.0
    %1290 = vmatmul.mubr.f32.gmra.mrb[0].mxu0 %v1194
    %v1291 = vpop.f32.mrb[0].mxu0
    %v1292 = vadd.f32 %v1179, %v1291
    %v1293 = vpop.f32.mrb[0].mxu0
    %1294 = vmatprep.mubr.f32.mxu0 0.0
    %1295 = vmatmul.mubr.f32.gmra.mrb[0].mxu0 %v1197
    %v1296 = vpop.f32.mrb[0].mxu0
    %v1297 = vadd.f32 %v1179, %v1296
    %v1298 = vpop.f32.mrb[0].mxu0
    %1299 = vmatprep.mubr.f32.mxu0 0.0
    %1300 = vmatmul.mubr.f32.gmra.mrb[0].mxu0 %v1200
    %v1301 = vpop.f32.mrb[0].mxu0
    %v1302 = vadd.f32 %v1179, %v1301
    %v1303 = vpop.f32.mrb[0].mxu0
    %1304 = vmatprep.mubr.f32.mxu0 0.0
    %1305 = vmatmul.mubr.f32.gmra.mrb[0].mxu0 %v1203
    %v1306 = vpop.f32.mrb[0].mxu0
    %v1307 = vadd.f32 %v1179, %v1306
    %v1308 = vpop.f32.mrb[0].mxu0
    %1309 = vdwg.mxu0
    %1310 = vst [vmem:[#allocation3] sm:$0xff] %v1272
    %1311 = vst [vmem:[#allocation3 + $0x8] sm:$0xff] %v1277
    %1312 = vst [vmem:[#allocation3 + $0x10] sm:$0xff] %v1282
    %1313 = vst [vmem:[#allocation3 + $0x18] sm:$0xff] %v1287
    %1314 = vst [vmem:[#allocation3 + $0x20] sm:$0xff] %v1292
    %1315 = vst [vmem:[#allocation3 + $0x28] sm:$0xff] %v1297
    %1316 = vst [vmem:[#allocation3 + $0x30] sm:$0xff] %v1302
    %1317 = vst [vmem:[#allocation3 + $0x38] sm:$0xff] %v1307
    %v1318 = vld [vmem:[#allocation15] sm:$0xff]
    %v1319 = vld [vmem:[#allocation15 + $0x8] sm:$0xff]
    %v1320 = vld [vmem:[#allocation15 + $0x10] sm:$0xff]
    %v1321 = vld [vmem:[#allocation15 + $0x18] sm:$0xff]
    %v1322 = vld [vmem:[#allocation3] sm:$0xff]
    %1323 = vmatprep.subr.mxu0 0.0
    %1324 = vmatpush1.msra.mxu0 %v1318
    %1325 = vmatprep.subr.mxu0 0.0
    %1326 = vmatpush1.msra.mxu0 %v1319
    %1327 = vmatprep.subr.mxu0 0.0
    %1328 = vmatpush1.msra.mxu0 %v1320
    %1329 = vmatprep.subr.mxu0 0.0
    %1330 = vmatpush1.msra.mxu0 %v1321
    %1331 = vmatprep.subr.mxu0 0.0
    %1332 = vmatpush1.msra.mxu0 0.0
    %1333 = vmatprep.subr.mxu0 0.0
    %1334 = vmatpush1.msra.mxu0 0.0
    %1335 = vmatprep.subr.mxu0 0.0
    %1336 = vmatpush1.msra.mxu0 0.0
    %1337 = vmatprep.subr.mxu0 0.0
    %1338 = vmatpush1.msra.mxu0 0.0
    %1339 = vmatprep.subr.mxu0 0.0
    %1340 = vmatpush1.msra.mxu0 0.0
    %1341 = vmatprep.subr.mxu0 0.0
    %1342 = vmatpush1.msra.mxu0 0.0
    %1343 = vmatprep.subr.mxu0 0.0
    %1344 = vmatpush1.msra.mxu0 0.0
    %1345 = vmatprep.subr.mxu0 0.0
    %1346 = vmatpush1.msra.mxu0 0.0
    %1347 = vmatprep.subr.mxu0 0.0
    %1348 = vmatpush1.msra.mxu0 0.0
    %1349 = vmatprep.subr.mxu0 0.0
    %1350 = vmatpush1.msra.mxu0 0.0
    %1351 = vmatprep.subr.mxu0 0.0
    %1352 = vmatpush1.msra.mxu0 0.0
    %1353 = vmatprep.subr.mxu0 0.0
    %1354 = vmatpush1.msra.mxu0 0.0
    %1355 = vmatprep.subr.mxu0 0.0
    %1356 = vmatpush1.msra.mxu0 0.0
    %1357 = vmatprep.subr.mxu0 0.0
    %1358 = vmatpush1.msra.mxu0 0.0
    %1359 = vmatprep.subr.mxu0 0.0
    %1360 = vmatpush1.msra.mxu0 0.0
    %1361 = vmatprep.subr.mxu0 0.0
    %1362 = vmatpush1.msra.mxu0 0.0
    %1363 = vmatprep.subr.mxu0 0.0
    %1364 = vmatpush1.msra.mxu0 0.0
    %1365 = vmatprep.subr.mxu0 0.0
    %1366 = vmatpush1.msra.mxu0 0.0
    %1367 = vmatprep.subr.mxu0 0.0
    %1368 = vmatpush1.msra.mxu0 0.0
    %1369 = vmatprep.subr.mxu0 0.0
    %1370 = vmatpush1.msra.mxu0 0.0
    %1371 = vmatprep.subr.mxu0 0.0
    %1372 = vmatpush1.msra.mxu0 0.0
    %1373 = vmatprep.subr.mxu0 0.0
    %1374 = vmatpush1.msra.mxu0 0.0
    %1375 = vmatprep.subr.mxu0 0.0
    %1376 = vmatpush1.msra.mxu0 0.0
    %1377 = vmatprep.subr.mxu0 0.0
    %1378 = vmatpush1.msra.mxu0 0.0
    %1379 = vmatprep.subr.mxu0 0.0
    %1380 = vmatpush1.msra.mxu0 0.0
    %1381 = vmatprep.subr.mxu0 0.0
    %1382 = vmatpush1.msra.mxu0 0.0
    %1383 = vmatprep.subr.mxu0 0.0
    %1384 = vmatpush1.msra.mxu0 0.0
    %1385 = vmatprep.subr.mxu0 0.0
    %1386 = vmatpush1.msra.mxu0 0.0
    %1387 = vmatprep.mubr.f32.mxu0 0.0
    %1388 = vmatmul.mubr.f32.gmra.mrb[0].mxu0 %v317
    %v1389 = vpop.f32.mrb[0].mxu0
    %v1390 = vadd.f32 0.0, %v1389
    %v1391 = vpop.f32.mrb[0].mxu0
    %1392 = vdwg.mxu0
    %v1393 = vadd.f32 %v1322, %v1390
    %v1394 = vtanh.pop %v1393
    %v1395 = vxor.u32 %v1393, 2147483648
    %v1396 = vmul.f32 %v1395, 1.442695
    %v1397 = vpow.pop %v1396
    %v1398 = vadd.f32 %v1397, 1.0
    %v1399 = vrcp.pop %v1398
    %v1400 = vmul.f32 1.0, %v1399
    %v1401 = vsel %vm310, %v1394, %v1400
    %v1402 = vmul.f32 %v1401, 0.0
    %1404 = vrot.lane.b32.xlu0 %v1401, 64
    %v1405 = vpop.permute.xlu0 %1404
    %v1407 = vmul.f32 %v1401, %v1405
    %1409 = vrot.lane.b32.xlu0 %v1407, 32
    %v1410 = vpop.permute.xlu0 %1409
    %v1412 = vadd.f32 %v1402, %v1410
    %v1413 = vtanh.pop %v1412
    %1415 = vrot.lane.b32.xlu0 %v1413, 64
    %v1416 = vpop.permute.xlu0 %1415
    %v1418 = vmul.f32 %v1401, %v1416
    %1420 = vrot.lane.b32.xlu0 %v1418, 32
    %v1421 = vpop.permute.xlu0 %1420
    %1423 = vst.msk [vmem:[#allocation5] sm:$0xff] %vm168, %v1421
    %s1424 = scalar_lea.vmem [#allocation3], 8
    %v1425 = vld [vmem:[%s1424] sm:$0xff]
    %v1426 = vsel %vm168, %v1421, 0
    %1428 = vmatprep.subr.mxu0 0.0
    %1429 = vmatpush1.msra.mxu0 %v1318
    %1430 = vmatprep.subr.mxu0 0.0
    %1431 = vmatpush1.msra.mxu0 %v1319
    %1432 = vmatprep.subr.mxu0 0.0
    %1433 = vmatpush1.msra.mxu0 %v1320
    %1434 = vmatprep.subr.mxu0 0.0
    %1435 = vmatpush1.msra.mxu0 %v1321
    %1436 = vmatprep.subr.mxu0 0.0
    %1437 = vmatpush1.msra.mxu0 0.0
    %1438 = vmatprep.subr.mxu0 0.0
    %1439 = vmatpush1.msra.mxu0 0.0
    %1440 = vmatprep.subr.mxu0 0.0
    %1441 = vmatpush1.msra.mxu0 0.0
    %1442 = vmatprep.subr.mxu0 0.0
    %1443 = vmatpush1.msra.mxu0 0.0
    %1444 = vmatprep.subr.mxu0 0.0
    %1445 = vmatpush1.msra.mxu0 0.0
    %1446 = vmatprep.subr.mxu0 0.0
    %1447 = vmatpush1.msra.mxu0 0.0
    %1448 = vmatprep.subr.mxu0 0.0
    %1449 = vmatpush1.msra.mxu0 0.0
    %1450 = vmatprep.subr.mxu0 0.0
    %1451 = vmatpush1.msra.mxu0 0.0
    %1452 = vmatprep.subr.mxu0 0.0
    %1453 = vmatpush1.msra.mxu0 0.0
    %1454 = vmatprep.subr.mxu0 0.0
    %1455 = vmatpush1.msra.mxu0 0.0
    %1456 = vmatprep.subr.mxu0 0.0
    %1457 = vmatpush1.msra.mxu0 0.0
    %1458 = vmatprep.subr.mxu0 0.0
    %1459 = vmatpush1.msra.mxu0 0.0
    %1460 = vmatprep.subr.mxu0 0.0
    %1461 = vmatpush1.msra.mxu0 0.0
    %1462 = vmatprep.subr.mxu0 0.0
    %1463 = vmatpush1.msra.mxu0 0.0
    %1464 = vmatprep.subr.mxu0 0.0
    %1465 = vmatpush1.msra.mxu0 0.0
    %1466 = vmatprep.subr.mxu0 0.0
    %1467 = vmatpush1.msra.mxu0 0.0
    %1468 = vmatprep.subr.mxu0 0.0
    %1469 = vmatpush1.msra.mxu0 0.0
    %1470 = vmatprep.subr.mxu0 0.0
    %1471 = vmatpush1.msra.mxu0 0.0
    %1472 = vmatprep.subr.mxu0 0.0
    %1473 = vmatpush1.msra.mxu0 0.0
    %1474 = vmatprep.subr.mxu0 0.0
    %1475 = vmatpush1.msra.mxu0 0.0
    %1476 = vmatprep.subr.mxu0 0.0
    %1477 = vmatpush1.msra.mxu0 0.0
    %1478 = vmatprep.subr.mxu0 0.0
    %1479 = vmatpush1.msra.mxu0 0.0
    %1480 = vmatprep.subr.mxu0 0.0
    %1481 = vmatpush1.msra.mxu0 0.0
    %1482 = vmatprep.subr.mxu0 0.0
    %1483 = vmatpush1.msra.mxu0 0.0
    %1484 = vmatprep.subr.mxu0 0.0
    %1485 = vmatpush1.msra.mxu0 0.0
    %1486 = vmatprep.subr.mxu0 0.0
    %1487 = vmatpush1.msra.mxu0 0.0
    %1488 = vmatprep.subr.mxu0 0.0
    %1489 = vmatpush1.msra.mxu0 0.0
    %1490 = vmatprep.subr.mxu0 0.0
    %1491 = vmatpush1.msra.mxu0 0.0
    %1492 = vmatprep.mubr.f32.mxu0 0.0
    %1493 = vmatmul.mubr.f32.gmra.mrb[0].mxu0 %v1426
    %v1494 = vpop.f32.mrb[0].mxu0
    %v1495 = vadd.f32 0.0, %v1494
    %v1496 = vpop.f32.mrb[0].mxu0
    %1497 = vdwg.mxu0
    %v1498 = vadd.f32 %v1425, %v1495
    %v1499 = vtanh.pop %v1498
    %v1500 = vxor.u32 %v1498, 2147483648
    %v1501 = vmul.f32 %v1500, 1.442695
    %v1502 = vpow.pop %v1501
    %v1503 = vadd.f32 %v1502, 1.0
    %v1504 = vrcp.pop %v1503
    %v1505 = vmul.f32 1.0, %v1504
    %v1506 = vsel %vm310, %v1499, %v1505
    %v1507 = vmul.f32 %v1506, %v1412
    %1509 = vrot.lane.b32.xlu0 %v1506, 64
    %v1510 = vpop.permute.xlu0 %1509
    %v1512 = vmul.f32 %v1506, %v1510
    %1514 = vrot.lane.b32.xlu0 %v1512, 32
    %v1515 = vpop.permute.xlu0 %1514
    %v1517 = vadd.f32 %v1507, %v1515
    %v1518 = vtanh.pop %v1517
    %1520 = vrot.lane.b32.xlu0 %v1518, 64
    %v1521 = vpop.permute.xlu0 %1520
    %v1523 = vmul.f32 %v1506, %v1521
    %1525 = vrot.lane.b32.xlu0 %v1523, 32
    %v1526 = vpop.permute.xlu0 %1525
    %s1528 = scalar_lea.vmem [#allocation5], 8
    %1529 = vst.msk [vmem:[%s1528] sm:$0xff] %vm168, %v1526
    %s1530 = scalar_lea.vmem [#allocation3], 16
    %v1531 = vld [vmem:[%s1530] sm:$0xff]
    %v1532 = vsel %vm168, %v1526, 0
    %1534 = vmatprep.subr.mxu0 0.0
    %1535 = vmatpush1.msra.mxu0 %v1318
    %1536 = vmatprep.subr.mxu0 0.0
    %1537 = vmatpush1.msra.mxu0 %v1319
    %1538 = vmatprep.subr.mxu0 0.0
    %1539 = vmatpush1.msra.mxu0 %v1320
    %1540 = vmatprep.subr.mxu0 0.0
    %1541 = vmatpush1.msra.mxu0 %v1321
    %1542 = vmatprep.subr.mxu0 0.0
    %1543 = vmatpush1.msra.mxu0 0.0
    %1544 = vmatprep.subr.mxu0 0.0
    %1545 = vmatpush1.msra.mxu0 0.0
    %1546 = vmatprep.subr.mxu0 0.0
    %1547 = vmatpush1.msra.mxu0 0.0
    %1548 = vmatprep.subr.mxu0 0.0
    %1549 = vmatpush1.msra.mxu0 0.0
    %1550 = vmatprep.subr.mxu0 0.0
    %1551 = vmatpush1.msra.mxu0 0.0
    %1552 = vmatprep.subr.mxu0 0.0
    %1553 = vmatpush1.msra.mxu0 0.0
    %1554 = vmatprep.subr.mxu0 0.0
    %1555 = vmatpush1.msra.mxu0 0.0
    %1556 = vmatprep.subr.mxu0 0.0
    %1557 = vmatpush1.msra.mxu0 0.0
    %1558 = vmatprep.subr.mxu0 0.0
    %1559 = vmatpush1.msra.mxu0 0.0
    %1560 = vmatprep.subr.mxu0 0.0
    %1561 = vmatpush1.msra.mxu0 0.0
    %1562 = vmatprep.subr.mxu0 0.0
    %1563 = vmatpush1.msra.mxu0 0.0
    %1564 = vmatprep.subr.mxu0 0.0
    %1565 = vmatpush1.msra.mxu0 0.0
    %1566 = vmatprep.subr.mxu0 0.0
    %1567 = vmatpush1.msra.mxu0 0.0
    %1568 = vmatprep.subr.mxu0 0.0
    %1569 = vmatpush1.msra.mxu0 0.0
    %1570 = vmatprep.subr.mxu0 0.0
    %1571 = vmatpush1.msra.mxu0 0.0
    %1572 = vmatprep.subr.mxu0 0.0
    %1573 = vmatpush1.msra.mxu0 0.0
    %1574 = vmatprep.subr.mxu0 0.0
    %1575 = vmatpush1.msra.mxu0 0.0
    %1576 = vmatprep.subr.mxu0 0.0
    %1577 = vmatpush1.msra.mxu0 0.0
    %1578 = vmatprep.subr.mxu0 0.0
    %1579 = vmatpush1.msra.mxu0 0.0
    %1580 = vmatprep.subr.mxu0 0.0
    %1581 = vmatpush1.msra.mxu0 0.0
    %1582 = vmatprep.subr.mxu0 0.0
    %1583 = vmatpush1.msra.mxu0 0.0
    %1584 = vmatprep.subr.mxu0 0.0
    %1585 = vmatpush1.msra.mxu0 0.0
    %1586 = vmatprep.subr.mxu0 0.0
    %1587 = vmatpush1.msra.mxu0 0.0
    %1588 = vmatprep.subr.mxu0 0.0
    %1589 = vmatpush1.msra.mxu0 0.0
    %1590 = vmatprep.subr.mxu0 0.0
    %1591 = vmatpush1.msra.mxu0 0.0
    %1592 = vmatprep.subr.mxu0 0.0
    %1593 = vmatpush1.msra.mxu0 0.0
    %1594 = vmatprep.subr.mxu0 0.0
    %1595 = vmatpush1.msra.mxu0 0.0
    %1596 = vmatprep.subr.mxu0 0.0
    %1597 = vmatpush1.msra.mxu0 0.0
    %1598 = vmatprep.mubr.f32.mxu0 0.0
    %1599 = vmatmul.mubr.f32.gmra.mrb[0].mxu0 %v1532
    %v1600 = vpop.f32.mrb[0].mxu0
    %v1601 = vadd.f32 0.0, %v1600
    %v1602 = vpop.f32.mrb[0].mxu0
    %1603 = vdwg.mxu0
    %v1604 = vadd.f32 %v1531, %v1601
    %v1605 = vtanh.pop %v1604
    %v1606 = vxor.u32 %v1604, 2147483648
    %v1607 = vmul.f32 %v1606, 1.442695
    %v1608 = vpow.pop %v1607
    %v1609 = vadd.f32 %v1608, 1.0
    %v1610 = vrcp.pop %v1609
    %v1611 = vmul.f32 1.0, %v1610
    %v1612 = vsel %vm310, %v1605, %v1611
    %v1613 = vmul.f32 %v1612, %v1517
    %1615 = vrot.lane.b32.xlu0 %v1612, 64
    %v1616 = vpop.permute.xlu0 %1615
    %v1618 = vmul.f32 %v1612, %v1616
    %1620 = vrot.lane.b32.xlu0 %v1618, 32
    %v1621 = vpop.permute.xlu0 %1620
    %v1623 = vadd.f32 %v1613, %v1621
    %v1624 = vtanh.pop %v1623
    %1626 = vrot.lane.b32.xlu0 %v1624, 64
    %v1627 = vpop.permute.xlu0 %1626
    %v1629 = vmul.f32 %v1612, %v1627
    %1631 = vrot.lane.b32.xlu0 %v1629, 32
    %v1632 = vpop.permute.xlu0 %1631
    %s1634 = scalar_lea.vmem [#allocation5], 16
    %1635 = vst.msk [vmem:[%s1634] sm:$0xff] %vm168, %v1632
    %s1636 = scalar_lea.vmem [#allocation3], 24
    %v1637 = vld [vmem:[%s1636] sm:$0xff]
    %v1638 = vsel %vm168, %v1632, 0
    %1640 = vmatprep.subr.mxu0 0.0
    %1641 = vmatpush1.msra.mxu0 %v1318
    %1642 = vmatprep.subr.mxu0 0.0
    %1643 = vmatpush1.msra.mxu0 %v1319
    %1644 = vmatprep.subr.mxu0 0.0
    %1645 = vmatpush1.msra.mxu0 %v1320
    %1646 = vmatprep.subr.mxu0 0.0
    %1647 = vmatpush1.msra.mxu0 %v1321
    %1648 = vmatprep.subr.mxu0 0.0
    %1649 = vmatpush1.msra.mxu0 0.0
    %1650 = vmatprep.subr.mxu0 0.0
    %1651 = vmatpush1.msra.mxu0 0.0
    %1652 = vmatprep.subr.mxu0 0.0
    %1653 = vmatpush1.msra.mxu0 0.0
    %1654 = vmatprep.subr.mxu0 0.0
    %1655 = vmatpush1.msra.mxu0 0.0
    %1656 = vmatprep.subr.mxu0 0.0
    %1657 = vmatpush1.msra.mxu0 0.0
    %1658 = vmatprep.subr.mxu0 0.0
    %1659 = vmatpush1.msra.mxu0 0.0
    %1660 = vmatprep.subr.mxu0 0.0
    %1661 = vmatpush1.msra.mxu0 0.0
    %1662 = vmatprep.subr.mxu0 0.0
    %1663 = vmatpush1.msra.mxu0 0.0
    %1664 = vmatprep.subr.mxu0 0.0
    %1665 = vmatpush1.msra.mxu0 0.0
    %1666 = vmatprep.subr.mxu0 0.0
    %1667 = vmatpush1.msra.mxu0 0.0
    %1668 = vmatprep.subr.mxu0 0.0
    %1669 = vmatpush1.msra.mxu0 0.0
    %1670 = vmatprep.subr.mxu0 0.0
    %1671 = vmatpush1.msra.mxu0 0.0
    %1672 = vmatprep.subr.mxu0 0.0
    %1673 = vmatpush1.msra.mxu0 0.0
    %1674 = vmatprep.subr.mxu0 0.0
    %1675 = vmatpush1.msra.mxu0 0.0
    %1676 = vmatprep.subr.mxu0 0.0
    %1677 = vmatpush1.msra.mxu0 0.0
    %1678 = vmatprep.subr.mxu0 0.0
    %1679 = vmatpush1.msra.mxu0 0.0
    %1680 = vmatprep.subr.mxu0 0.0
    %1681 = vmatpush1.msra.mxu0 0.0
    %1682 = vmatprep.subr.mxu0 0.0
    %1683 = vmatpush1.msra.mxu0 0.0
    %1684 = vmatprep.subr.mxu0 0.0
    %1685 = vmatpush1.msra.mxu0 0.0
    %1686 = vmatprep.subr.mxu0 0.0
    %1687 = vmatpush1.msra.mxu0 0.0
    %1688 = vmatprep.subr.mxu0 0.0
    %1689 = vmatpush1.msra.mxu0 0.0
    %1690 = vmatprep.subr.mxu0 0.0
    %1691 = vmatpush1.msra.mxu0 0.0
    %1692 = vmatprep.subr.mxu0 0.0
    %1693 = vmatpush1.msra.mxu0 0.0
    %1694 = vmatprep.subr.mxu0 0.0
    %1695 = vmatpush1.msra.mxu0 0.0
    %1696 = vmatprep.subr.mxu0 0.0
    %1697 = vmatpush1.msra.mxu0 0.0
    %1698 = vmatprep.subr.mxu0 0.0
    %1699 = vmatpush1.msra.mxu0 0.0
    %1700 = vmatprep.subr.mxu0 0.0
    %1701 = vmatpush1.msra.mxu0 0.0
    %1702 = vmatprep.subr.mxu0 0.0
    %1703 = vmatpush1.msra.mxu0 0.0
    %1704 = vmatprep.mubr.f32.mxu0 0.0
    %1705 = vmatmul.mubr.f32.gmra.mrb[0].mxu0 %v1638
    %v1706 = vpop.f32.mrb[0].mxu0
    %v1707 = vadd.f32 0.0, %v1706
    %v1708 = vpop.f32.mrb[0].mxu0
    %1709 = vdwg.mxu0
    %v1710 = vadd.f32 %v1637, %v1707
    %v1711 = vtanh.pop %v1710
    %v1712 = vxor.u32 %v1710, 2147483648
    %v1713 = vmul.f32 %v1712, 1.442695
    %v1714 = vpow.pop %v1713
    %v1715 = vadd.f32 %v1714, 1.0
    %v1716 = vrcp.pop %v1715
    %v1717 = vmul.f32 1.0, %v1716
    %v1718 = vsel %vm310, %v1711, %v1717
    %v1719 = vmul.f32 %v1718, %v1623
    %1721 = vrot.lane.b32.xlu0 %v1718, 64
    %v1722 = vpop.permute.xlu0 %1721
    %v1724 = vmul.f32 %v1718, %v1722
    %1726 = vrot.lane.b32.xlu0 %v1724, 32
    %v1727 = vpop.permute.xlu0 %1726
    %v1729 = vadd.f32 %v1719, %v1727
    %v1730 = vtanh.pop %v1729
    %1732 = vrot.lane.b32.xlu0 %v1730, 64
    %v1733 = vpop.permute.xlu0 %1732
    %v1735 = vmul.f32 %v1718, %v1733
    %1737 = vrot.lane.b32.xlu0 %v1735, 32
    %v1738 = vpop.permute.xlu0 %1737
    %s1740 = scalar_lea.vmem [#allocation5], 24
    %1741 = vst.msk [vmem:[%s1740] sm:$0xff] %vm168, %v1738
    %s1742 = scalar_lea.vmem [#allocation3], 32
    %v1743 = vld [vmem:[%s1742] sm:$0xff]
    %v1744 = vsel %vm168, %v1738, 0
    %1746 = vmatprep.subr.mxu0 0.0
    %1747 = vmatpush1.msra.mxu0 %v1318
    %1748 = vmatprep.subr.mxu0 0.0
    %1749 = vmatpush1.msra.mxu0 %v1319
    %1750 = vmatprep.subr.mxu0 0.0
    %1751 = vmatpush1.msra.mxu0 %v1320
    %1752 = vmatprep.subr.mxu0 0.0
    %1753 = vmatpush1.msra.mxu0 %v1321
    %1754 = vmatprep.subr.mxu0 0.0
    %1755 = vmatpush1.msra.mxu0 0.0
    %1756 = vmatprep.subr.mxu0 0.0
    %1757 = vmatpush1.msra.mxu0 0.0
    %1758 = vmatprep.subr.mxu0 0.0
    %1759 = vmatpush1.msra.mxu0 0.0
    %1760 = vmatprep.subr.mxu0 0.0
    %1761 = vmatpush1.msra.mxu0 0.0
    %1762 = vmatprep.subr.mxu0 0.0
    %1763 = vmatpush1.msra.mxu0 0.0
    %1764 = vmatprep.subr.mxu0 0.0
    %1765 = vmatpush1.msra.mxu0 0.0
    %1766 = vmatprep.subr.mxu0 0.0
    %1767 = vmatpush1.msra.mxu0 0.0
    %1768 = vmatprep.subr.mxu0 0.0
    %1769 = vmatpush1.msra.mxu0 0.0
    %1770 = vmatprep.subr.mxu0 0.0
    %1771 = vmatpush1.msra.mxu0 0.0
    %1772 = vmatprep.subr.mxu0 0.0
    %1773 = vmatpush1.msra.mxu0 0.0
    %1774 = vmatprep.subr.mxu0 0.0
    %1775 = vmatpush1.msra.mxu0 0.0
    %1776 = vmatprep.subr.mxu0 0.0
    %1777 = vmatpush1.msra.mxu0 0.0
    %1778 = vmatprep.subr.mxu0 0.0
    %1779 = vmatpush1.msra.mxu0 0.0
    %1780 = vmatprep.subr.mxu0 0.0
    %1781 = vmatpush1.msra.mxu0 0.0
    %1782 = vmatprep.subr.mxu0 0.0
    %1783 = vmatpush1.msra.mxu0 0.0
    %1784 = vmatprep.subr.mxu0 0.0
    %1785 = vmatpush1.msra.mxu0 0.0
    %1786 = vmatprep.subr.mxu0 0.0
    %1787 = vmatpush1.msra.mxu0 0.0
    %1788 = vmatprep.subr.mxu0 0.0
    %1789 = vmatpush1.msra.mxu0 0.0
    %1790 = vmatprep.subr.mxu0 0.0
    %1791 = vmatpush1.msra.mxu0 0.0
    %1792 = vmatprep.subr.mxu0 0.0
    %1793 = vmatpush1.msra.mxu0 0.0
    %1794 = vmatprep.subr.mxu0 0.0
    %1795 = vmatpush1.msra.mxu0 0.0
    %1796 = vmatprep.subr.mxu0 0.0
    %1797 = vmatpush1.msra.mxu0 0.0
    %1798 = vmatprep.subr.mxu0 0.0
    %1799 = vmatpush1.msra.mxu0 0.0
    %1800 = vmatprep.subr.mxu0 0.0
    %1801 = vmatpush1.msra.mxu0 0.0
    %1802 = vmatprep.subr.mxu0 0.0
    %1803 = vmatpush1.msra.mxu0 0.0
    %1804 = vmatprep.subr.mxu0 0.0
    %1805 = vmatpush1.msra.mxu0 0.0
    %1806 = vmatprep.subr.mxu0 0.0
    %1807 = vmatpush1.msra.mxu0 0.0
    %1808 = vmatprep.subr.mxu0 0.0
    %1809 = vmatpush1.msra.mxu0 0.0
    %1810 = vmatprep.mubr.f32.mxu0 0.0
    %1811 = vmatmul.mubr.f32.gmra.mrb[0].mxu0 %v1744
    %v1812 = vpop.f32.mrb[0].mxu0
    %v1813 = vadd.f32 0.0, %v1812
    %v1814 = vpop.f32.mrb[0].mxu0
    %1815 = vdwg.mxu0
    %v1816 = vadd.f32 %v1743, %v1813
    %v1817 = vtanh.pop %v1816
    %v1818 = vxor.u32 %v1816, 2147483648
    %v1819 = vmul.f32 %v1818, 1.442695
    %v1820 = vpow.pop %v1819
    %v1821 = vadd.f32 %v1820, 1.0
    %v1822 = vrcp.pop %v1821
    %v1823 = vmul.f32 1.0, %v1822
    %v1824 = vsel %vm310, %v1817, %v1823
    %v1825 = vmul.f32 %v1824, %v1729
    %1827 = vrot.lane.b32.xlu0 %v1824, 64
    %v1828 = vpop.permute.xlu0 %1827
    %v1830 = vmul.f32 %v1824, %v1828
    %1832 = vrot.lane.b32.xlu0 %v1830, 32
    %v1833 = vpop.permute.xlu0 %1832
    %v1835 = vadd.f32 %v1825, %v1833
    %v1836 = vtanh.pop %v1835
    %1838 = vrot.lane.b32.xlu0 %v1836, 64
    %v1839 = vpop.permute.xlu0 %1838
    %v1841 = vmul.f32 %v1824, %v1839
    %1843 = vrot.lane.b32.xlu0 %v1841, 32
    %v1844 = vpop.permute.xlu0 %1843
    %s1846 = scalar_lea.vmem [#allocation5], 32
    %1847 = vst.msk [vmem:[%s1846] sm:$0xff] %vm168, %v1844
    %s1848 = scalar_lea.vmem [#allocation3], 40
    %v1849 = vld [vmem:[%s1848] sm:$0xff]
    %v1850 = vsel %vm168, %v1844, 0
    %1852 = vmatprep.subr.mxu0 0.0
    %1853 = vmatpush1.msra.mxu0 %v1318
    %1854 = vmatprep.subr.mxu0 0.0
    %1855 = vmatpush1.msra.mxu0 %v1319
    %1856 = vmatprep.subr.mxu0 0.0
    %1857 = vmatpush1.msra.mxu0 %v1320
    %1858 = vmatprep.subr.mxu0 0.0
    %1859 = vmatpush1.msra.mxu0 %v1321
    %1860 = vmatprep.subr.mxu0 0.0
    %1861 = vmatpush1.msra.mxu0 0.0
    %1862 = vmatprep.subr.mxu0 0.0
    %1863 = vmatpush1.msra.mxu0 0.0
    %1864 = vmatprep.subr.mxu0 0.0
    %1865 = vmatpush1.msra.mxu0 0.0
    %1866 = vmatprep.subr.mxu0 0.0
    %1867 = vmatpush1.msra.mxu0 0.0
    %1868 = vmatprep.subr.mxu0 0.0
    %1869 = vmatpush1.msra.mxu0 0.0
    %1870 = vmatprep.subr.mxu0 0.0
    %1871 = vmatpush1.msra.mxu0 0.0
    %1872 = vmatprep.subr.mxu0 0.0
    %1873 = vmatpush1.msra.mxu0 0.0
    %1874 = vmatprep.subr.mxu0 0.0
    %1875 = vmatpush1.msra.mxu0 0.0
    %1876 = vmatprep.subr.mxu0 0.0
    %1877 = vmatpush1.msra.mxu0 0.0
    %1878 = vmatprep.subr.mxu0 0.0
    %1879 = vmatpush1.msra.mxu0 0.0
    %1880 = vmatprep.subr.mxu0 0.0
    %1881 = vmatpush1.msra.mxu0 0.0
    %1882 = vmatprep.subr.mxu0 0.0
    %1883 = vmatpush1.msra.mxu0 0.0
    %1884 = vmatprep.subr.mxu0 0.0
    %1885 = vmatpush1.msra.mxu0 0.0
    %1886 = vmatprep.subr.mxu0 0.0
    %1887 = vmatpush1.msra.mxu0 0.0
    %1888 = vmatprep.subr.mxu0 0.0
    %1889 = vmatpush1.msra.mxu0 0.0
    %1890 = vmatprep.subr.mxu0 0.0
    %1891 = vmatpush1.msra.mxu0 0.0
    %1892 = vmatprep.subr.mxu0 0.0
    %1893 = vmatpush1.msra.mxu0 0.0
    %1894 = vmatprep.subr.mxu0 0.0
    %1895 = vmatpush1.msra.mxu0 0.0
    %1896 = vmatprep.subr.mxu0 0.0
    %1897 = vmatpush1.msra.mxu0 0.0
    %1898 = vmatprep.subr.mxu0 0.0
    %1899 = vmatpush1.msra.mxu0 0.0
    %1900 = vmatprep.subr.mxu0 0.0
    %1901 = vmatpush1.msra.mxu0 0.0
    %1902 = vmatprep.subr.mxu0 0.0
    %1903 = vmatpush1.msra.mxu0 0.0
    %1904 = vmatprep.subr.mxu0 0.0
    %1905 = vmatpush1.msra.mxu0 0.0
    %1906 = vmatprep.subr.mxu0 0.0
    %1907 = vmatpush1.msra.mxu0 0.0
    %1908 = vmatprep.subr.mxu0 0.0
    %1909 = vmatpush1.msra.mxu0 0.0
    %1910 = vmatprep.subr.mxu0 0.0
    %1911 = vmatpush1.msra.mxu0 0.0
    %1912 = vmatprep.subr.mxu0 0.0
    %1913 = vmatpush1.msra.mxu0 0.0
    %1914 = vmatprep.subr.mxu0 0.0
    %1915 = vmatpush1.msra.mxu0 0.0
    %1916 = vmatprep.mubr.f32.mxu0 0.0
    %1917 = vmatmul.mubr.f32.gmra.mrb[0].mxu0 %v1850
    %v1918 = vpop.f32.mrb[0].mxu0
    %v1919 = vadd.f32 0.0, %v1918
    %v1920 = vpop.f32.mrb[0].mxu0
    %1921 = vdwg.mxu0
    %v1922 = vadd.f32 %v1849, %v1919
    %v1923 = vtanh.pop %v1922
    %v1924 = vxor.u32 %v1922, 2147483648
    %v1925 = vmul.f32 %v1924, 1.442695
    %v1926 = vpow.pop %v1925
    %v1927 = vadd.f32 %v1926, 1.0
    %v1928 = vrcp.pop %v1927
    %v1929 = vmul.f32 1.0, %v1928
    %v1930 = vsel %vm310, %v1923, %v1929
    %v1931 = vmul.f32 %v1930, %v1835
    %1933 = vrot.lane.b32.xlu0 %v1930, 64
    %v1934 = vpop.permute.xlu0 %1933
    %v1936 = vmul.f32 %v1930, %v1934
    %1938 = vrot.lane.b32.xlu0 %v1936, 32
    %v1939 = vpop.permute.xlu0 %1938
    %v1941 = vadd.f32 %v1931, %v1939
    %v1942 = vtanh.pop %v1941
    %1944 = vrot.lane.b32.xlu0 %v1942, 64
    %v1945 = vpop.permute.xlu0 %1944
    %v1947 = vmul.f32 %v1930, %v1945
    %1949 = vrot.lane.b32.xlu0 %v1947, 32
    %v1950 = vpop.permute.xlu0 %1949
    %s1952 = scalar_lea.vmem [#allocation5], 40
    %1953 = vst.msk [vmem:[%s1952] sm:$0xff] %vm168, %v1950
    %s1954 = scalar_lea.vmem [#allocation3], 48
    %v1955 = vld [vmem:[%s1954] sm:$0xff]
    %v1956 = vsel %vm168, %v1950, 0
    %1958 = vmatprep.subr.mxu0 0.0
    %1959 = vmatpush1.msra.mxu0 %v1318
    %1960 = vmatprep.subr.mxu0 0.0
    %1961 = vmatpush1.msra.mxu0 %v1319
    %1962 = vmatprep.subr.mxu0 0.0
    %1963 = vmatpush1.msra.mxu0 %v1320
    %1964 = vmatprep.subr.mxu0 0.0
    %1965 = vmatpush1.msra.mxu0 %v1321
    %1966 = vmatprep.subr.mxu0 0.0
    %1967 = vmatpush1.msra.mxu0 0.0
    %1968 = vmatprep.subr.mxu0 0.0
    %1969 = vmatpush1.msra.mxu0 0.0
    %1970 = vmatprep.subr.mxu0 0.0
    %1971 = vmatpush1.msra.mxu0 0.0
    %1972 = vmatprep.subr.mxu0 0.0
    %1973 = vmatpush1.msra.mxu0 0.0
    %1974 = vmatprep.subr.mxu0 0.0
    %1975 = vmatpush1.msra.mxu0 0.0
    %1976 = vmatprep.subr.mxu0 0.0
    %1977 = vmatpush1.msra.mxu0 0.0
    %1978 = vmatprep.subr.mxu0 0.0
    %1979 = vmatpush1.msra.mxu0 0.0
    %1980 = vmatprep.subr.mxu0 0.0
    %1981 = vmatpush1.msra.mxu0 0.0
    %1982 = vmatprep.subr.mxu0 0.0
    %1983 = vmatpush1.msra.mxu0 0.0
    %1984 = vmatprep.subr.mxu0 0.0
    %1985 = vmatpush1.msra.mxu0 0.0
    %1986 = vmatprep.subr.mxu0 0.0
    %1987 = vmatpush1.msra.mxu0 0.0
    %1988 = vmatprep.subr.mxu0 0.0
    %1989 = vmatpush1.msra.mxu0 0.0
    %1990 = vmatprep.subr.mxu0 0.0
    %1991 = vmatpush1.msra.mxu0 0.0
    %1992 = vmatprep.subr.mxu0 0.0
    %1993 = vmatpush1.msra.mxu0 0.0
    %1994 = vmatprep.subr.mxu0 0.0
    %1995 = vmatpush1.msra.mxu0 0.0
    %1996 = vmatprep.subr.mxu0 0.0
    %1997 = vmatpush1.msra.mxu0 0.0
    %1998 = vmatprep.subr.mxu0 0.0
    %1999 = vmatpush1.msra.mxu0 0.0
    %2000 = vmatprep.subr.mxu0 0.0
    %2001 = vmatpush1.msra.mxu0 0.0
    %2002 = vmatprep.subr.mxu0 0.0
    %2003 = vmatpush1.msra.mxu0 0.0
    %2004 = vmatprep.subr.mxu0 0.0
    %2005 = vmatpush1.msra.mxu0 0.0
    %2006 = vmatprep.subr.mxu0 0.0
    %2007 = vmatpush1.msra.mxu0 0.0
    %2008 = vmatprep.subr.mxu0 0.0
    %2009 = vmatpush1.msra.mxu0 0.0
    %2010 = vmatprep.subr.mxu0 0.0
    %2011 = vmatpush1.msra.mxu0 0.0
    %2012 = vmatprep.subr.mxu0 0.0
    %2013 = vmatpush1.msra.mxu0 0.0
    %2014 = vmatprep.subr.mxu0 0.0
    %2015 = vmatpush1.msra.mxu0 0.0
    %2016 = vmatprep.subr.mxu0 0.0
    %2017 = vmatpush1.msra.mxu0 0.0
    %2018 = vmatprep.subr.mxu0 0.0
    %2019 = vmatpush1.msra.mxu0 0.0
    %2020 = vmatprep.subr.mxu0 0.0
    %2021 = vmatpush1.msra.mxu0 0.0
    %2022 = vmatprep.mubr.f32.mxu0 0.0
    %2023 = vmatmul.mubr.f32.gmra.mrb[0].mxu0 %v1956
    %v2024 = vpop.f32.mrb[0].mxu0
    %v2025 = vadd.f32 0.0, %v2024
    %v2026 = vpop.f32.mrb[0].mxu0
    %2027 = vdwg.mxu0
    %v2028 = vadd.f32 %v1955, %v2025
    %v2029 = vtanh.pop %v2028
    %v2030 = vxor.u32 %v2028, 2147483648
    %v2031 = vmul.f32 %v2030, 1.442695
    %v2032 = vpow.pop %v2031
    %v2033 = vadd.f32 %v2032, 1.0
    %v2034 = vrcp.pop %v2033
    %v2035 = vmul.f32 1.0, %v2034
    %v2036 = vsel %vm310, %v2029, %v2035
    %v2037 = vmul.f32 %v2036, %v1941
    %2039 = vrot.lane.b32.xlu0 %v2036, 64
    %v2040 = vpop.permute.xlu0 %2039
    %v2042 = vmul.f32 %v2036, %v2040
    %2044 = vrot.lane.b32.xlu0 %v2042, 32
    %v2045 = vpop.permute.xlu0 %2044
    %v2047 = vadd.f32 %v2037, %v2045
    %v2048 = vtanh.pop %v2047
    %2050 = vrot.lane.b32.xlu0 %v2048, 64
    %v2051 = vpop.permute.xlu0 %2050
    %v2053 = vmul.f32 %v2036, %v2051
    %2055 = vrot.lane.b32.xlu0 %v2053, 32
    %v2056 = vpop.permute.xlu0 %2055
    %s2058 = scalar_lea.vmem [#allocation5], 48
    %2059 = vst.msk [vmem:[%s2058] sm:$0xff] %vm168, %v2056
    %s2060 = scalar_lea.vmem [#allocation3], 56
    %v2061 = vld [vmem:[%s2060] sm:$0xff]
    %v2062 = vsel %vm168, %v2056, 0
    %2064 = vmatprep.subr.mxu0 0.0
    %2065 = vmatpush1.msra.mxu0 %v1318
    %2066 = vmatprep.subr.mxu0 0.0
    %2067 = vmatpush1.msra.mxu0 %v1319
    %2068 = vmatprep.subr.mxu0 0.0
    %2069 = vmatpush1.msra.mxu0 %v1320
    %2070 = vmatprep.subr.mxu0 0.0
    %2071 = vmatpush1.msra.mxu0 %v1321
    %2072 = vmatprep.subr.mxu0 0.0
    %2073 = vmatpush1.msra.mxu0 0.0
    %2074 = vmatprep.subr.mxu0 0.0
    %2075 = vmatpush1.msra.mxu0 0.0
    %2076 = vmatprep.subr.mxu0 0.0
    %2077 = vmatpush1.msra.mxu0 0.0
    %2078 = vmatprep.subr.mxu0 0.0
    %2079 = vmatpush1.msra.mxu0 0.0
    %2080 = vmatprep.subr.mxu0 0.0
    %2081 = vmatpush1.msra.mxu0 0.0
    %2082 = vmatprep.subr.mxu0 0.0
    %2083 = vmatpush1.msra.mxu0 0.0
    %2084 = vmatprep.subr.mxu0 0.0
    %2085 = vmatpush1.msra.mxu0 0.0
    %2086 = vmatprep.subr.mxu0 0.0
    %2087 = vmatpush1.msra.mxu0 0.0
    %2088 = vmatprep.subr.mxu0 0.0
    %2089 = vmatpush1.msra.mxu0 0.0
    %2090 = vmatprep.subr.mxu0 0.0
    %2091 = vmatpush1.msra.mxu0 0.0
    %2092 = vmatprep.subr.mxu0 0.0
    %2093 = vmatpush1.msra.mxu0 0.0
    %2094 = vmatprep.subr.mxu0 0.0
    %2095 = vmatpush1.msra.mxu0 0.0
    %2096 = vmatprep.subr.mxu0 0.0
    %2097 = vmatpush1.msra.mxu0 0.0
    %2098 = vmatprep.subr.mxu0 0.0
    %2099 = vmatpush1.msra.mxu0 0.0
    %2100 = vmatprep.subr.mxu0 0.0
    %2101 = vmatpush1.msra.mxu0 0.0
    %2102 = vmatprep.subr.mxu0 0.0
    %2103 = vmatpush1.msra.mxu0 0.0
    %2104 = vmatprep.subr.mxu0 0.0
    %2105 = vmatpush1.msra.mxu0 0.0
    %2106 = vmatprep.subr.mxu0 0.0
    %2107 = vmatpush1.msra.mxu0 0.0
    %2108 = vmatprep.subr.mxu0 0.0
    %2109 = vmatpush1.msra.mxu0 0.0
    %2110 = vmatprep.subr.mxu0 0.0
    %2111 = vmatpush1.msra.mxu0 0.0
    %2112 = vmatprep.subr.mxu0 0.0
    %2113 = vmatpush1.msra.mxu0 0.0
    %2114 = vmatprep.subr.mxu0 0.0
    %2115 = vmatpush1.msra.mxu0 0.0
    %2116 = vmatprep.subr.mxu0 0.0
    %2117 = vmatpush1.msra.mxu0 0.0
    %2118 = vmatprep.subr.mxu0 0.0
    %2119 = vmatpush1.msra.mxu0 0.0
    %2120 = vmatprep.subr.mxu0 0.0
    %2121 = vmatpush1.msra.mxu0 0.0
    %2122 = vmatprep.subr.mxu0 0.0
    %2123 = vmatpush1.msra.mxu0 0.0
    %2124 = vmatprep.subr.mxu0 0.0
    %2125 = vmatpush1.msra.mxu0 0.0
    %2126 = vmatprep.subr.mxu0 0.0
    %2127 = vmatpush1.msra.mxu0 0.0
    %2128 = vmatprep.mubr.f32.mxu0 0.0
    %2129 = vmatmul.mubr.f32.gmra.mrb[0].mxu0 %v2062
    %v2130 = vpop.f32.mrb[0].mxu0
    %v2131 = vadd.f32 0.0, %v2130
    %v2132 = vpop.f32.mrb[0].mxu0
    %2133 = vdwg.mxu0
    %v2134 = vadd.f32 %v2061, %v2131
    %v2135 = vtanh.pop %v2134
    %v2136 = vxor.u32 %v2134, 2147483648
    %v2137 = vmul.f32 %v2136, 1.442695
    %v2138 = vpow.pop %v2137
    %v2139 = vadd.f32 %v2138, 1.0
    %v2140 = vrcp.pop %v2139
    %v2141 = vmul.f32 1.0, %v2140
    %v2142 = vsel %vm310, %v2135, %v2141
    %v2143 = vmul.f32 %v2142, %v2047
    %2145 = vrot.lane.b32.xlu0 %v2142, 64
    %v2146 = vpop.permute.xlu0 %2145
    %v2148 = vmul.f32 %v2142, %v2146
    %2150 = vrot.lane.b32.xlu0 %v2148, 32
    %v2151 = vpop.permute.xlu0 %2150
    %v2153 = vadd.f32 %v2143, %v2151
    %v2154 = vtanh.pop %v2153
    %2156 = vrot.lane.b32.xlu0 %v2154, 64
    %v2157 = vpop.permute.xlu0 %2156
    %v2159 = vmul.f32 %v2142, %v2157
    %2161 = vrot.lane.b32.xlu0 %v2159, 32
    %v2162 = vpop.permute.xlu0 %2161
    %s2164 = scalar_lea.vmem [#allocation5], 56
    %2165 = vst.msk [vmem:[%s2164] sm:$0xff] %vm168, %v2162
    %v2166 = vld [vmem:[#allocation5] sm:$0xff]
    %v2167 = vld [vmem:[#allocation5 + $0x8] sm:$0xff]
    %v2168 = vld [vmem:[#allocation5 + $0x10] sm:$0xff]
    %v2169 = vld [vmem:[#allocation5 + $0x18] sm:$0xff]
    %v2170 = vld [vmem:[#allocation5 + $0x20] sm:$0xff]
    %v2171 = vld [vmem:[#allocation5 + $0x28] sm:$0xff]
    %v2172 = vld [vmem:[#allocation5 + $0x30] sm:$0xff]
    %v2173 = vld [vmem:[#allocation5 + $0x38] sm:$0xff]
    %v2174 = vld [vmem:[#allocation18] sm:$0xff]
    %v2175 = vld [vmem:[#allocation18 + $0x8] sm:$0xff]
    %v2176 = vld [vmem:[#allocation18 + $0x10] sm:$0xff]
    %v2177 = vld [vmem:[#allocation18 + $0x18] sm:$0xff]
    %v2178 = vld [vmem:[#allocation20] sm:$0x1]
    %v2180 = vlaneseq
    %v2181 = vshrl.u32 %v2180, 7
    %v2182 = vsub.s32 0, %v2181
    %v2183 = vrot.slane %v2178, %v2182
    %v2186 = vsel %vm168, %v2166, 0
    %v2189 = vsel %vm168, %v2167, 0
    %v2192 = vsel %vm168, %v2168, 0
    %v2195 = vsel %vm168, %v2169, 0
    %v2198 = vsel %vm168, %v2170, 0
    %v2201 = vsel %vm168, %v2171, 0
    %v2204 = vsel %vm168, %v2172, 0
    %v2207 = vsel %vm168, %v2173, 0
    %2209 = vmatprep.subr.mxu0 0.0
    %2210 = vmatpush1.msra.mxu0 %v2174
    %2211 = vmatprep.subr.mxu0 0.0
    %2212 = vmatpush1.msra.mxu0 %v2175
    %2213 = vmatprep.subr.mxu0 0.0
    %2214 = vmatpush1.msra.mxu0 %v2176
    %2215 = vmatprep.subr.mxu0 0.0
    %2216 = vmatpush1.msra.mxu0 %v2177
    %2217 = vmatprep.subr.mxu0 0.0
    %2218 = vmatpush1.msra.mxu0 0.0
    %2219 = vmatprep.subr.mxu0 0.0
    %2220 = vmatpush1.msra.mxu0 0.0
    %2221 = vmatprep.subr.mxu0 0.0
    %2222 = vmatpush1.msra.mxu0 0.0
    %2223 = vmatprep.subr.mxu0 0.0
    %2224 = vmatpush1.msra.mxu0 0.0
    %2225 = vmatprep.subr.mxu0 0.0
    %2226 = vmatpush1.msra.mxu0 0.0
    %2227 = vmatprep.subr.mxu0 0.0
    %2228 = vmatpush1.msra.mxu0 0.0
    %2229 = vmatprep.subr.mxu0 0.0
    %2230 = vmatpush1.msra.mxu0 0.0
    %2231 = vmatprep.subr.mxu0 0.0
    %2232 = vmatpush1.msra.mxu0 0.0
    %2233 = vmatprep.subr.mxu0 0.0
    %2234 = vmatpush1.msra.mxu0 0.0
    %2235 = vmatprep.subr.mxu0 0.0
    %2236 = vmatpush1.msra.mxu0 0.0
    %2237 = vmatprep.subr.mxu0 0.0
    %2238 = vmatpush1.msra.mxu0 0.0
    %2239 = vmatprep.subr.mxu0 0.0
    %2240 = vmatpush1.msra.mxu0 0.0
    %2241 = vmatprep.subr.mxu0 0.0
    %2242 = vmatpush1.msra.mxu0 0.0
    %2243 = vmatprep.subr.mxu0 0.0
    %2244 = vmatpush1.msra.mxu0 0.0
    %2245 = vmatprep.subr.mxu0 0.0
    %2246 = vmatpush1.msra.mxu0 0.0
    %2247 = vmatprep.subr.mxu0 0.0
    %2248 = vmatpush1.msra.mxu0 0.0
    %2249 = vmatprep.subr.mxu0 0.0
    %2250 = vmatpush1.msra.mxu0 0.0
    %2251 = vmatprep.subr.mxu0 0.0
    %2252 = vmatpush1.msra.mxu0 0.0
    %2253 = vmatprep.subr.mxu0 0.0
    %2254 = vmatpush1.msra.mxu0 0.0
    %2255 = vmatprep.subr.mxu0 0.0
    %2256 = vmatpush1.msra.mxu0 0.0
    %2257 = vmatprep.subr.mxu0 0.0
    %2258 = vmatpush1.msra.mxu0 0.0
    %2259 = vmatprep.subr.mxu0 0.0
    %2260 = vmatpush1.msra.mxu0 0.0
    %2261 = vmatprep.subr.mxu0 0.0
    %2262 = vmatpush1.msra.mxu0 0.0
    %2263 = vmatprep.subr.mxu0 0.0
    %2264 = vmatpush1.msra.mxu0 0.0
    %2265 = vmatprep.subr.mxu0 0.0
    %2266 = vmatpush1.msra.mxu0 0.0
    %2267 = vmatprep.subr.mxu0 0.0
    %2268 = vmatpush1.msra.mxu0 0.0
    %2269 = vmatprep.subr.mxu0 0.0
    %2270 = vmatpush1.msra.mxu0 0.0
    %2271 = vmatprep.subr.mxu0 0.0
    %2272 = vmatpush1.msra.mxu0 0.0
    %2273 = vmatprep.mubr.f32.mxu0 0.0
    %2274 = vmatmul.mubr.f32.gmra.mrb[0].mxu0 %v2186
    %v2275 = vpop.f32.mrb[0].mxu0
    %v2276 = vadd.f32 %v2183, %v2275
    %v2277 = vpop.f32.mrb[0].mxu0
    %2278 = vmatprep.mubr.f32.mxu0 0.0
    %2279 = vmatmul.mubr.f32.gmra.mrb[0].mxu0 %v2189
    %v2280 = vpop.f32.mrb[0].mxu0
    %v2281 = vadd.f32 %v2183, %v2280
    %v2282 = vpop.f32.mrb[0].mxu0
    %2283 = vmatprep.mubr.f32.mxu0 0.0
    %2284 = vmatmul.mubr.f32.gmra.mrb[0].mxu0 %v2192
    %v2285 = vpop.f32.mrb[0].mxu0
    %v2286 = vadd.f32 %v2183, %v2285
    %v2287 = vpop.f32.mrb[0].mxu0
    %2288 = vmatprep.mubr.f32.mxu0 0.0
    %2289 = vmatmul.mubr.f32.gmra.mrb[0].mxu0 %v2195
    %v2290 = vpop.f32.mrb[0].mxu0
    %v2291 = vadd.f32 %v2183, %v2290
    %v2292 = vpop.f32.mrb[0].mxu0
    %2293 = vmatprep.mubr.f32.mxu0 0.0
    %2294 = vmatmul.mubr.f32.gmra.mrb[0].mxu0 %v2198
    %v2295 = vpop.f32.mrb[0].mxu0
    %v2296 = vadd.f32 %v2183, %v2295
    %v2297 = vpop.f32.mrb[0].mxu0
    %2298 = vmatprep.mubr.f32.mxu0 0.0
    %2299 = vmatmul.mubr.f32.gmra.mrb[0].mxu0 %v2201
    %v2300 = vpop.f32.mrb[0].mxu0
    %v2301 = vadd.f32 %v2183, %v2300
    %v2302 = vpop.f32.mrb[0].mxu0
    %2303 = vmatprep.mubr.f32.mxu0 0.0
    %2304 = vmatmul.mubr.f32.gmra.mrb[0].mxu0 %v2204
    %v2305 = vpop.f32.mrb[0].mxu0
    %v2306 = vadd.f32 %v2183, %v2305
    %v2307 = vpop.f32.mrb[0].mxu0
    %2308 = vmatprep.mubr.f32.mxu0 0.0
    %2309 = vmatmul.mubr.f32.gmra.mrb[0].mxu0 %v2207
    %v2310 = vpop.f32.mrb[0].mxu0
    %v2311 = vadd.f32 %v2183, %v2310
    %v2312 = vpop.f32.mrb[0].mxu0
    %2313 = vdwg.mxu0
    %2314 = vst.msk [vmem:[#allocation21] sm:$0xff] %vm168, %v2276
    %2315 = vst.msk [vmem:[#allocation21 + $0x8] sm:$0xff] %vm168, %v2281
    %2316 = vst.msk [vmem:[#allocation21 + $0x10] sm:$0xff] %vm168, %v2286
    %2317 = vst.msk [vmem:[#allocation21 + $0x18] sm:$0xff] %vm168, %v2291
    %2318 = vst.msk [vmem:[#allocation21 + $0x20] sm:$0xff] %vm168, %v2296
    %2319 = vst.msk [vmem:[#allocation21 + $0x28] sm:$0xff] %vm168, %v2301
    %2320 = vst.msk [vmem:[#allocation21 + $0x30] sm:$0xff] %vm168, %v2306
    %2321 = vst.msk [vmem:[#allocation21 + $0x38] sm:$0xff] %vm168, %v2311
    // Predicated region
    $region74: #{tpu_custom_call.1} parent=1 // pred_check
      _
    $region75: #{tpu_custom_call.1} parent=1 // pred_check_branch
      %2323 = sbr.rel (0) target = $region77
    $region76: #{tpu_custom_call.1} parent=1 // pred_region
      %s2325 = ssub.s32 1024, 1024
      %2326 = vsyncadd [#allocation8], %s2325
      %s2327 = sshll.u32 [#allocation21], 4
      %s2328 = int_to_ptr.vmem [resolvable:$true] %s2327
      %2333 = dma.vmem_to_hbm [thread:$0]  %s2328, 1024, %s9, [#allocation8], 128, 128, 8
    $region77: #{tpu_custom_call.1} parent=1 // pred_fallthru
      _
    // Predicated region
    $region78: #{tpu_custom_call.1} parent=1 // pred_check
      _
    $region79: #{tpu_custom_call.1} parent=1 // pred_check_branch
      %2335 = sbr.rel (0) target = $region81
    $region80: #{tpu_custom_call.1} parent=1 // pred_region
      %2336 = dma.done [#allocation8], 1024
    $region81: #{tpu_custom_call.1} parent=1 // pred_fallthru
      _
    %2337 = vsyncpa [#allocation7], 1
    %2338 = vsyncpa [#allocation10], 1
    %2339 = vsyncpa [#allocation13], 1
    %2340 = vsyncpa [#allocation16], 1
    %2341 = vsyncpa [#allocation19], 1
    %2342 = vsyncpa [#allocation8], 1

</llo_original>
